<compile_context>
chip_gen: v7x
topology: tpu7x:2x2x1
jax: 0.10.0
libtpu: 0.0.40
codegen_flags: <defaults>
</compile_context>

<pallas_src>
import functools
import math

import jax
import jax.numpy as jnp
from jax.experimental import pallas as pl
from jax.experimental.pallas import tpu as pltpu

# ----------------------------- model constants ------------------------------
CHUNK_SIZE = 160          # raw audio samples per streaming chunk
FRAME = 40                # samples per feature frame (CHUNK_SIZE % FRAME == 0)
FRAMES_PER_CHUNK = CHUNK_SIZE // FRAME
INPUT_FEATURE_SIZE = 240
DECODER_FEATURE_SIZE = 128
VOCAB_SIZE = 16

FE_PAD = 256              # 240 -> 256 lane-dense FE hidden
VPAD = 128                # 16  -> 128 lane-dense vocab outputs
MAX_TT = 512              # time-tile cap (rows per grid step)


def _round_up(x: int, m: int) -> int:
    return ((x + m - 1) // m) * m


# --------------- fused FE + Encoder + CTC + attention decoder ----------------
def _fused_kernel(lens_ref, frames_ref, teacher_ref,
                  wfe_ref, bfe_ref, wenc_ref, benc_ref, wctc_ref,
                  wq_ref, bq_ref, wout_ref,
                  ctc_ref, att_ref,
                  q_sc, m_sc, l_sc, acc_sc, *, tt, scale):
    b = pl.program_id(0)
    t = pl.program_id(1)

    @pl.when(t == 0)
    def _():
        # query projection of the teacher labels (once per batch row)
        q = jnp.dot(teacher_ref[0], wq_ref[...],
                    preferred_element_type=jnp.float32)
        q_sc[...] = (q + bq_ref[...]).astype(jnp.bfloat16)
        m_sc[...] = jnp.full_like(m_sc, -1e30)
        l_sc[...] = jnp.zeros_like(l_sc)
        acc_sc[...] = jnp.zeros_like(acc_sc)

    # ---- FeatureExtractor + Encoder on this time tile (never leaves VMEM) ----
    x = frames_ref[0]                                          # (TT, 40) bf16
    h = jnp.dot(x, wfe_ref[...], preferred_element_type=jnp.float32)
    h = jnp.maximum(h + bfe_ref[...], 0.0).astype(jnp.bfloat16)   # FE ReLU
    e = jnp.dot(h, wenc_ref[...], preferred_element_type=jnp.float32)
    e = jnp.maximum(e + benc_ref[...], 0.0)                       # Enc ReLU
    e_bf = e.astype(jnp.bfloat16)                              # (TT, 128)

    # ---- CTC head: bf16, 128-lane padded output (sliced in the wrapper) ----
    ctc_ref[0] = jnp.dot(e_bf, wctc_ref[...],
                         preferred_element_type=jnp.float32).astype(ctc_ref.dtype)

    # ---- flash-style masked cross-attention over this key/value tile ----
    s = jax.lax.dot_general(q_sc[...], e_bf, (((1,), (1,)), ((), ())),
                            preferred_element_type=jnp.float32) * scale
    kidx = t * tt + jax.lax.broadcasted_iota(jnp.int32, s.shape, 1)
    mask = kidx < lens_ref[b]
    # online softmax; masked keys contribute exactly zero, so encode_len == 0
    # yields a zero context instead of attending to padding.
    m_new = jnp.maximum(
        m_sc[...], jnp.max(jnp.where(mask, s, -1e30), axis=-1, keepdims=True))
    alpha = jnp.exp(m_sc[...] - m_new)
    p = jnp.where(mask, jnp.exp(s - m_new), 0.0)
    l_sc[...] = alpha * l_sc[...] + jnp.sum(p, axis=-1, keepdims=True)
    acc_sc[...] = alpha * acc_sc[...] + jnp.dot(
        p.astype(jnp.bfloat16), e_bf, preferred_element_type=jnp.float32)
    m_sc[...] = m_new

    @pl.when(t == pl.num_programs(1) - 1)
    def _():
        inv = pl.reciprocal(jnp.maximum(l_sc[...], 1e-30), approx=True)
        ctx = (acc_sc[...] * inv).astype(jnp.bfloat16)
        att_ref[0] = jnp.dot(ctx, wout_ref[...],
                             preferred_element_type=jnp.float32)


def fused_asr_kernel(encode_len, frames, teacher_p, params, *, tt):
    """frames:(B,T_pad,FRAME)bf16, teacher_p:(B,Tt_pad,V)bf16
       -> (ctc (B,T_pad,VPAD) bf16, att (B,Tt_pad,VPAD) f32)."""
    B, T_pad, _ = frames.shape
    Tt_pad = teacher_p.shape[1]
    D = DECODER_FEATURE_SIZE

    grid_spec = pltpu.PrefetchScalarGridSpec(
        num_scalar_prefetch=1,
        grid=(B, T_pad // tt),
        in_specs=[
            pl.BlockSpec((1, tt, FRAME), lambda b, t, lens: (b, t, 0)),
            pl.BlockSpec((1, Tt_pad, VOCAB_SIZE), lambda b, t, lens: (b, 0, 0)),
            pl.BlockSpec((FRAME, FE_PAD), lambda b, t, lens: (0, 0)),
            pl.BlockSpec((1, FE_PAD), lambda b, t, lens: (0, 0)),
            pl.BlockSpec((FE_PAD, D), lambda b, t, lens: (0, 0)),
            pl.BlockSpec((1, D), lambda b, t, lens: (0, 0)),
            pl.BlockSpec((D, VPAD), lambda b, t, lens: (0, 0)),
            pl.BlockSpec((VOCAB_SIZE, D), lambda b, t, lens: (0, 0)),
            pl.BlockSpec((1, D), lambda b, t, lens: (0, 0)),
            pl.BlockSpec((D, VPAD), lambda b, t, lens: (0, 0)),
        ],
        out_specs=(
            pl.BlockSpec((1, tt, VPAD), lambda b, t, lens: (b, t, 0)),
            pl.BlockSpec((1, Tt_pad, VPAD), lambda b, t, lens: (b, 0, 0)),
        ),
        scratch_shapes=[
            pltpu.VMEM((Tt_pad, D), jnp.bfloat16),   # projected queries
            pltpu.VMEM((Tt_pad, 1), jnp.float32),    # running max
            pltpu.VMEM((Tt_pad, 1), jnp.float32),    # running denom
            pltpu.VMEM((Tt_pad, D), jnp.float32),    # context accumulator
        ],
    )
    return pl.pallas_call(
        functools.partial(_fused_kernel, tt=tt, scale=1.0 / math.sqrt(D)),
        out_shape=(jax.ShapeDtypeStruct((B, T_pad, VPAD), jnp.bfloat16),
                   jax.ShapeDtypeStruct((B, Tt_pad, VPAD), jnp.float32)),
        grid_spec=grid_spec,
        compiler_params=pltpu.CompilerParams(
            dimension_semantics=("parallel", "arbitrary")),
    )(encode_len.astype(jnp.int32), frames, teacher_p,
      params["w_fe_p"], params["b_fe_p"], params["w_enc_p"], params["b_enc_p"],
      params["w_ctc_p"], params["w_q_p"], params["b_q_p"], params["w_out_p"])


# ------------------------------ parameter init ------------------------------
def init_params(key):
    ks = jax.random.split(key, 6)
    scale = 0.05
    return {
        "w_fe": scale * jax.random.normal(ks[0], (FRAME, INPUT_FEATURE_SIZE), jnp.float32),
        "b_fe": jnp.zeros((INPUT_FEATURE_SIZE,), jnp.float32),
        "w_enc": scale * jax.random.normal(ks[1], (INPUT_FEATURE_SIZE, DECODER_FEATURE_SIZE), jnp.float32),
        "b_enc": jnp.zeros((DECODER_FEATURE_SIZE,), jnp.float32),
        "w_ctc": scale * jax.random.normal(ks[2], (DECODER_FEATURE_SIZE, VOCAB_SIZE), jnp.float32),
        "w_q": scale * jax.random.normal(ks[3], (VOCAB_SIZE, DECODER_FEATURE_SIZE), jnp.float32),
        "b_q": jnp.zeros((DECODER_FEATURE_SIZE,), jnp.float32),
        "w_out": scale * jax.random.normal(ks[4], (DECODER_FEATURE_SIZE, VOCAB_SIZE), jnp.float32),
    }


def prepare_params(p):
    """Pad to lane-dense shapes and cast matmul operands to bf16 (done once)."""
    return {
        "w_fe_p": jnp.pad(p["w_fe"], ((0, 0), (0, FE_PAD - INPUT_FEATURE_SIZE))).astype(jnp.bfloat16),
        "b_fe_p": jnp.pad(p["b_fe"], (0, FE_PAD - INPUT_FEATURE_SIZE)).reshape(1, FE_PAD).astype(jnp.float32),
        "w_enc_p": jnp.pad(p["w_enc"], ((0, FE_PAD - INPUT_FEATURE_SIZE), (0, 0))).astype(jnp.bfloat16),
        "b_enc_p": p["b_enc"].reshape(1, DECODER_FEATURE_SIZE).astype(jnp.float32),
        "w_ctc_p": jnp.pad(p["w_ctc"], ((0, 0), (0, VPAD - VOCAB_SIZE))).astype(jnp.bfloat16),
        "w_q_p": p["w_q"].astype(jnp.bfloat16),
        "b_q_p": p["b_q"].reshape(1, DECODER_FEATURE_SIZE).astype(jnp.float32),
        "w_out_p": jnp.pad(p["w_out"], ((0, 0), (0, VPAD - VOCAB_SIZE))).astype(jnp.bfloat16),
    }


# -------------------------------- forward pass -------------------------------
def asr_forward(params, audio, audio_lengths, teacher, teacher_lengths):
    """Mirrors ASRModel.forward.

    Returns (encode_len (B,) int32, ctc_output (B, T, V), att_output (B, Tt, V)).
    """
    B, A = audio.shape
    n_chunks = -(-A // CHUNK_SIZE)                     # matches torch.split(CHUNK_SIZE)
    A_pad = n_chunks * CHUNK_SIZE
    T = n_chunks * FRAMES_PER_CHUNK

    # frame-count bookkeeping in plain JAX (vectorized over chunks; same
    # per-chunk clamp/floor semantics as the reference loop).
    chunk_ids = jnp.arange(n_chunks, dtype=jnp.int32)
    item_lengths = jnp.clip(audio_lengths[:, None].astype(jnp.int32)
                            - chunk_ids[None, :] * CHUNK_SIZE, 0, CHUNK_SIZE)
    encode_len = jnp.sum(item_lengths // FRAME, axis=1).astype(jnp.int32)

    # time-axis tiling (rows per grid step)
    TT = _round_up(min(T, MAX_TT), 16)
    T_pad = _round_up(T, TT)

    # frame the whole padded waveform once
    audio_p = jnp.pad(audio, ((0, 0), (0, A_pad - A)))
    frames = audio_p.reshape(B, T, FRAME)
    frames = jnp.pad(frames, ((0, 0), (0, T_pad - T), (0, 0))).astype(jnp.bfloat16)

    Tt = teacher.shape[1]
    Tt_pad = _round_up(Tt, 16)
    teacher_p = jnp.pad(teacher, ((0, 0), (0, Tt_pad - Tt), (0, 0))).astype(jnp.bfloat16)

    ctc_pad, att_pad = fused_asr_kernel(encode_len, frames, teacher_p, params, tt=TT)

    # NOTE: in a training pipeline the 128-lane padded logits should flow
    # directly into the loss kernel (mask there) instead of slicing here.
    ctc_output = ctc_pad[:, :T, :VOCAB_SIZE].astype(jnp.float32)
    att_output = att_pad[:, :Tt, :VOCAB_SIZE]

    # TODO(synk): teacher_lengths masking inside the decoder is unavailable in
    # the reference; query rows beyond teacher_lengths are left unmasked.
    return encode_len, ctc_output, att_output


# ----------------------------------- main ------------------------------------
if __name__ == "__main__":
    key = jax.random.PRNGKey(0)
    k_par, k_audio, k_teacher = jax.random.split(key, 3)

    B = 2
    AUDIO_LEN = 2 * CHUNK_SIZE            # 320 samples -> 2 chunks -> 8 frames
    T_TEACHER = 8

    params = prepare_params(init_params(k_par))
    audio = jax.random.normal(k_audio, (B, AUDIO_LEN), jnp.float32)
    audio_lengths = jnp.array([AUDIO_LEN, 250], jnp.int32)       # ragged batch
    teacher = jax.random.normal(k_teacher, (B, T_TEACHER, VOCAB_SIZE), jnp.float32)
    teacher_lengths = jnp.array([T_TEACHER, 5], jnp.int32)

    fwd = jax.jit(asr_forward)
    encode_len, ctc_out, att_out = fwd(params, audio, audio_lengths,
                                       teacher, teacher_lengths)
    jax.block_until_ready((encode_len, ctc_out, att_out))

    assert encode_len.shape == (B,)
    assert ctc_out.shape == (B, AUDIO_LEN // FRAME, VOCAB_SIZE)
    assert att_out.shape == (B, T_TEACHER, VOCAB_SIZE)
    assert bool(jnp.all(jnp.isfinite(ctc_out))) and bool(jnp.all(jnp.isfinite(att_out)))
    print("KERNEL_OK")
</pallas_src>

<mosaic_0001>
module attributes {stable_mosaic.version = 11 : i64} {
  func.func @_fused_kernel(%arg0: i32, %arg1: i32, %arg2: memref<2xi32, #tpu.memory_space<smem>>, %arg3: memref<1x16x40xbf16, #tpu.memory_space<vmem>>, %arg4: memref<1x16x16xbf16, #tpu.memory_space<vmem>>, %arg5: memref<40x256xbf16, #tpu.memory_space<vmem>>, %arg6: memref<1x256xf32, #tpu.memory_space<vmem>>, %arg7: memref<256x128xbf16, #tpu.memory_space<vmem>>, %arg8: memref<1x128xf32, #tpu.memory_space<vmem>>, %arg9: memref<128x128xbf16, #tpu.memory_space<vmem>>, %arg10: memref<16x128xbf16, #tpu.memory_space<vmem>>, %arg11: memref<1x128xf32, #tpu.memory_space<vmem>>, %arg12: memref<128x128xbf16, #tpu.memory_space<vmem>>, %arg13: memref<1x16x128xbf16, #tpu.memory_space<vmem>>, %arg14: memref<1x16x128xf32, #tpu.memory_space<vmem>>, %arg15: memref<16x128xbf16, #tpu.memory_space<vmem>>, %arg16: memref<16x1xf32, #tpu.memory_space<vmem>>, %arg17: memref<16x1xf32, #tpu.memory_space<vmem>>, %arg18: memref<16x128xf32, #tpu.memory_space<vmem>>) attributes {dimension_semantics = [#tpu.dimension_semantics<parallel>, #tpu.dimension_semantics<arbitrary>], iteration_bounds = array<i64: 2, 1>, scalar_prefetch = 1 : i64, scratch_operands = 4 : i64, tpu.core_type = #tpu.core_type<tc>, window_params = [{transform_indices = @transform_0, window_bounds = array<i64: 1, 16, 40>}, {transform_indices = @transform_1, window_bounds = array<i64: 1, 16, 16>}, {pipeline_mode = #tpu.pipeline_mode<synchronous>, transform_indices = @transform_2, window_bounds = array<i64: 40, 256>}, {pipeline_mode = #tpu.pipeline_mode<synchronous>, transform_indices = @transform_3, window_bounds = array<i64: 1, 256>}, {pipeline_mode = #tpu.pipeline_mode<synchronous>, transform_indices = @transform_4, window_bounds = array<i64: 256, 128>}, {pipeline_mode = #tpu.pipeline_mode<synchronous>, transform_indices = @transform_5, window_bounds = array<i64: 1, 128>}, {pipeline_mode = #tpu.pipeline_mode<synchronous>, transform_indices = @transform_6, window_bounds = array<i64: 128, 128>}, {pipeline_mode = #tpu.pipeline_mode<synchronous>, transform_indices = @transform_7, window_bounds = array<i64: 16, 128>}, {pipeline_mode = #tpu.pipeline_mode<synchronous>, transform_indices = @transform_8, window_bounds = array<i64: 1, 128>}, {pipeline_mode = #tpu.pipeline_mode<synchronous>, transform_indices = @transform_9, window_bounds = array<i64: 128, 128>}, {transform_indices = @transform_10, window_bounds = array<i64: 1, 16, 128>}, {transform_indices = @transform_11, window_bounds = array<i64: 1, 16, 128>}]} {
    %c0_i32 = arith.constant 0 : i32
    %0 = arith.cmpi eq, %arg1, %c0_i32 : i32
    %1 = arith.extui %0 : i1 to i32
    %c0_i32_0 = arith.constant 0 : i32
    %2 = arith.cmpi ne, %1, %c0_i32_0 : i32
    scf.if %2 {
      %c0_45 = arith.constant 0 : index
      %c0_46 = arith.constant 0 : index
      %c0_47 = arith.constant 0 : index
      %70 = vector.load %arg4[%c0_45, %c0_46, %c0_47] : memref<1x16x16xbf16, #tpu.memory_space<vmem>>, vector<1x16x16xbf16>
      %71 = vector.shape_cast %70 : vector<1x16x16xbf16> to vector<16x16xbf16>
      %c0_48 = arith.constant 0 : index
      %c0_49 = arith.constant 0 : index
      %72 = vector.load %arg10[%c0_48, %c0_49] : memref<16x128xbf16, #tpu.memory_space<vmem>>, vector<16x128xbf16>
      %cst_50 = arith.constant dense<0.000000e+00> : vector<16x128xf32>
      %73 = tpu.matmul %71, %72, %cst_50 {dimension_numbers = #tpu.dot_dimension_numbers<[1], [0], [0], [1], [0, 0, 1, 1], [], []>} : vector<16x16xbf16>, vector<16x128xbf16>, vector<16x128xf32> -> vector<16x128xf32>
      %c0_51 = arith.constant 0 : index
      %c0_52 = arith.constant 0 : index
      %74 = vector.load %arg11[%c0_51, %c0_52] : memref<1x128xf32, #tpu.memory_space<vmem>>, vector<1x128xf32>
      %75 = vector.broadcast %74 : vector<1x128xf32> to vector<16x128xf32>
      %76 = arith.addf %73, %75 : vector<16x128xf32>
      %77 = arith.truncf %76 : vector<16x128xf32> to vector<16x128xbf16>
      %c0_53 = arith.constant 0 : index
      %c0_54 = arith.constant 0 : index
      %78 = vector.load %arg15[%c0_53, %c0_54] : memref<16x128xbf16, #tpu.memory_space<vmem>>, vector<16x128xbf16>
      tpu.vector_store %arg15[%c0_53, %c0_54], %77 {strides = array<i32>} : memref<16x128xbf16, #tpu.memory_space<vmem>>, vector<16x128xbf16>,
      %cst_55 = arith.constant -1.000000e+30 : f32
      %79 = vector.broadcast %cst_55 : f32 to vector<16x1xf32>
      %c0_56 = arith.constant 0 : index
      %c0_57 = arith.constant 0 : index
      %80 = vector.load %arg16[%c0_56, %c0_57] : memref<16x1xf32, #tpu.memory_space<vmem>>, vector<16x1xf32>
      tpu.vector_store %arg16[%c0_56, %c0_57], %79 {strides = array<i32>} : memref<16x1xf32, #tpu.memory_space<vmem>>, vector<16x1xf32>,
      %cst_58 = arith.constant 0.000000e+00 : f32
      %81 = vector.broadcast %cst_58 : f32 to vector<16x1xf32>
      %c0_59 = arith.constant 0 : index
      %c0_60 = arith.constant 0 : index
      %82 = vector.load %arg17[%c0_59, %c0_60] : memref<16x1xf32, #tpu.memory_space<vmem>>, vector<16x1xf32>
      tpu.vector_store %arg17[%c0_59, %c0_60], %81 {strides = array<i32>} : memref<16x1xf32, #tpu.memory_space<vmem>>, vector<16x1xf32>,
      %cst_61 = arith.constant 0.000000e+00 : f32
      %83 = vector.broadcast %cst_61 : f32 to vector<16x128xf32>
      %c0_62 = arith.constant 0 : index
      %c0_63 = arith.constant 0 : index
      %84 = vector.load %arg18[%c0_62, %c0_63] : memref<16x128xf32, #tpu.memory_space<vmem>>, vector<16x128xf32>
      tpu.vector_store %arg18[%c0_62, %c0_63], %83 {strides = array<i32>} : memref<16x128xf32, #tpu.memory_space<vmem>>, vector<16x128xf32>,
    } else {
    }
    %c0 = arith.constant 0 : index
    %c0_1 = arith.constant 0 : index
    %c0_2 = arith.constant 0 : index
    %3 = vector.load %arg3[%c0, %c0_1, %c0_2] : memref<1x16x40xbf16, #tpu.memory_space<vmem>>, vector<1x16x40xbf16>
    %4 = vector.shape_cast %3 : vector<1x16x40xbf16> to vector<16x40xbf16>
    %c0_3 = arith.constant 0 : index
    %c0_4 = arith.constant 0 : index
    %5 = vector.load %arg5[%c0_3, %c0_4] : memref<40x256xbf16, #tpu.memory_space<vmem>>, vector<40x256xbf16>
    %cst = arith.constant dense<0.000000e+00> : vector<16x256xf32>
    %6 = tpu.matmul %4, %5, %cst {dimension_numbers = #tpu.dot_dimension_numbers<[1], [0], [0], [1], [0, 0, 1, 1], [], []>} : vector<16x40xbf16>, vector<40x256xbf16>, vector<16x256xf32> -> vector<16x256xf32>
    %c0_5 = arith.constant 0 : index
    %c0_6 = arith.constant 0 : index
    %7 = vector.load %arg6[%c0_5, %c0_6] : memref<1x256xf32, #tpu.memory_space<vmem>>, vector<1x256xf32>
    %8 = vector.broadcast %7 : vector<1x256xf32> to vector<16x256xf32>
    %9 = arith.addf %6, %8 : vector<16x256xf32>
    %cst_7 = arith.constant 0.000000e+00 : f32
    %10 = vector.broadcast %cst_7 : f32 to vector<16x256xf32>
    %11 = arith.maximumf %9, %10 : vector<16x256xf32>
    %12 = arith.truncf %11 : vector<16x256xf32> to vector<16x256xbf16>
    %c0_8 = arith.constant 0 : index
    %c0_9 = arith.constant 0 : index
    %13 = vector.load %arg7[%c0_8, %c0_9] : memref<256x128xbf16, #tpu.memory_space<vmem>>, vector<256x128xbf16>
    %cst_10 = arith.constant dense<0.000000e+00> : vector<16x128xf32>
    %14 = tpu.matmul %12, %13, %cst_10 {dimension_numbers = #tpu.dot_dimension_numbers<[1], [0], [0], [1], [0, 0, 1, 1], [], []>} : vector<16x256xbf16>, vector<256x128xbf16>, vector<16x128xf32> -> vector<16x128xf32>
    %c0_11 = arith.constant 0 : index
    %c0_12 = arith.constant 0 : index
    %15 = vector.load %arg8[%c0_11, %c0_12] : memref<1x128xf32, #tpu.memory_space<vmem>>, vector<1x128xf32>
    %16 = vector.broadcast %15 : vector<1x128xf32> to vector<16x128xf32>
    %17 = arith.addf %14, %16 : vector<16x128xf32>
    %cst_13 = arith.constant 0.000000e+00 : f32
    %18 = vector.broadcast %cst_13 : f32 to vector<16x128xf32>
    %19 = arith.maximumf %17, %18 : vector<16x128xf32>
    %20 = arith.truncf %19 : vector<16x128xf32> to vector<16x128xbf16>
    %c0_14 = arith.constant 0 : index
    %c0_15 = arith.constant 0 : index
    %21 = vector.load %arg9[%c0_14, %c0_15] : memref<128x128xbf16, #tpu.memory_space<vmem>>, vector<128x128xbf16>
    %cst_16 = arith.constant dense<0.000000e+00> : vector<16x128xf32>
    %22 = tpu.matmul %20, %21, %cst_16 {dimension_numbers = #tpu.dot_dimension_numbers<[1], [0], [0], [1], [0, 0, 1, 1], [], []>} : vector<16x128xbf16>, vector<128x128xbf16>, vector<16x128xf32> -> vector<16x128xf32>
    %23 = arith.truncf %22 : vector<16x128xf32> to vector<16x128xbf16>
    %c0_17 = arith.constant 0 : index
    %c0_18 = arith.constant 0 : index
    %c0_19 = arith.constant 0 : index
    %24 = vector.load %arg13[%c0_17, %c0_18, %c0_19] : memref<1x16x128xbf16, #tpu.memory_space<vmem>>, vector<1x16x128xbf16>
    %25 = vector.shape_cast %24 : vector<1x16x128xbf16> to vector<16x128xbf16>
    %26 = vector.shape_cast %23 : vector<16x128xbf16> to vector<1x16x128xbf16>
    tpu.vector_store %arg13[%c0_17, %c0_18, %c0_19], %26 {strides = array<i32>} : memref<1x16x128xbf16, #tpu.memory_space<vmem>>, vector<1x16x128xbf16>,
    %c0_20 = arith.constant 0 : index
    %c0_21 = arith.constant 0 : index
    %27 = vector.load %arg15[%c0_20, %c0_21] : memref<16x128xbf16, #tpu.memory_space<vmem>>, vector<16x128xbf16>
    %cst_22 = arith.constant dense<0.000000e+00> : vector<16x16xf32>
    %28 = tpu.matmul %27, %20, %cst_22 {dimension_numbers = #tpu.dot_dimension_numbers<[1], [1], [0], [0], [0, 0, 1, 0], [], []>} : vector<16x128xbf16>, vector<16x128xbf16>, vector<16x16xf32> -> vector<16x16xf32>
    %cst_23 = arith.constant 0.0883883461 : f32
    %29 = vector.broadcast %cst_23 : f32 to vector<16x16xf32>
    %30 = arith.mulf %28, %29 : vector<16x16xf32>
    %c16_i32 = arith.constant 16 : i32
    %31 = arith.muli %arg1, %c16_i32 : i32
    %32 = tpu.iota {dimensions = array<i32: 1>} : vector<16x16xi32>
    %33 = vector.broadcast %31 : i32 to vector<16x16xi32>
    %34 = arith.addi %33, %32 : vector<16x16xi32>
    %35 = arith.index_cast %arg0 : i32 to index
    %36 = memref.load %arg2[%35] : memref<2xi32, #tpu.memory_space<smem>>
    %37 = vector.broadcast %36 : i32 to vector<16x16xi32>
    %38 = arith.cmpi slt, %34, %37 : vector<16x16xi32>
    %c0_24 = arith.constant 0 : index
    %c0_25 = arith.constant 0 : index
    %39 = vector.load %arg16[%c0_24, %c0_25] : memref<16x1xf32, #tpu.memory_space<vmem>>, vector<16x1xf32>
    %cst_26 = arith.constant -1.000000e+30 : f32
    %40 = vector.broadcast %cst_26 : f32 to vector<16x16xf32>
    %41 = arith.select %38, %30, %40 : vector<16x16xi1>, vector<16x16xf32>
    %cst_27 = arith.constant dense<0xFF800000> : vector<16xf32>
    %42 = vector.multi_reduction <maximumf>, %41, %cst_27 [1] : vector<16x16xf32> to vector<16xf32>
    %43 = vector.shape_cast %42 : vector<16xf32> to vector<16x1xf32>
    %44 = arith.maximumf %39, %43 : vector<16x1xf32>
    %c0_28 = arith.constant 0 : index
    %c0_29 = arith.constant 0 : index
    %45 = vector.load %arg16[%c0_28, %c0_29] : memref<16x1xf32, #tpu.memory_space<vmem>>, vector<16x1xf32>
    %46 = arith.subf %45, %44 : vector<16x1xf32>
    %47 = math.exp %46 : vector<16x1xf32>
    %48 = vector.broadcast %44 : vector<16x1xf32> to vector<16x16xf32>
    %49 = arith.subf %30, %48 : vector<16x16xf32>
    %50 = math.exp %49 : vector<16x16xf32>
    %cst_30 = arith.constant 0.000000e+00 : f32
    %51 = vector.broadcast %cst_30 : f32 to vector<16x16xf32>
    %52 = arith.select %38, %50, %51 : vector<16x16xi1>, vector<16x16xf32>
    %c0_31 = arith.constant 0 : index
    %c0_32 = arith.constant 0 : index
    %53 = vector.load %arg17[%c0_31, %c0_32] : memref<16x1xf32, #tpu.memory_space<vmem>>, vector<16x1xf32>
    %54 = arith.mulf %47, %53 : vector<16x1xf32>
    %cst_33 = arith.constant dense<0.000000e+00> : vector<16xf32>
    %55 = vector.multi_reduction <add>, %52, %cst_33 [1] : vector<16x16xf32> to vector<16xf32>
    %56 = vector.shape_cast %55 : vector<16xf32> to vector<16x1xf32>
    %57 = arith.addf %54, %56 : vector<16x1xf32>
    %c0_34 = arith.constant 0 : index
    %c0_35 = arith.constant 0 : index
    %58 = vector.load %arg17[%c0_34, %c0_35] : memref<16x1xf32, #tpu.memory_space<vmem>>, vector<16x1xf32>
    tpu.vector_store %arg17[%c0_34, %c0_35], %57 {strides = array<i32>} : memref<16x1xf32, #tpu.memory_space<vmem>>, vector<16x1xf32>,
    %c0_36 = arith.constant 0 : index
    %c0_37 = arith.constant 0 : index
    %59 = vector.load %arg18[%c0_36, %c0_37] : memref<16x128xf32, #tpu.memory_space<vmem>>, vector<16x128xf32>
    %60 = vector.broadcast %47 : vector<16x1xf32> to vector<16x128xf32>
    %61 = arith.mulf %60, %59 : vector<16x128xf32>
    %62 = arith.truncf %52 : vector<16x16xf32> to vector<16x16xbf16>
    %cst_38 = arith.constant dense<0.000000e+00> : vector<16x128xf32>
    %63 = tpu.matmul %62, %20, %cst_38 {dimension_numbers = #tpu.dot_dimension_numbers<[1], [0], [0], [1], [0, 0, 1, 1], [], []>} : vector<16x16xbf16>, vector<16x128xbf16>, vector<16x128xf32> -> vector<16x128xf32>
    %64 = arith.addf %61, %63 : vector<16x128xf32>
    %c0_39 = arith.constant 0 : index
    %c0_40 = arith.constant 0 : index
    %65 = vector.load %arg18[%c0_39, %c0_40] : memref<16x128xf32, #tpu.memory_space<vmem>>, vector<16x128xf32>
    tpu.vector_store %arg18[%c0_39, %c0_40], %64 {strides = array<i32>} : memref<16x128xf32, #tpu.memory_space<vmem>>, vector<16x128xf32>,
    %c0_41 = arith.constant 0 : index
    %c0_42 = arith.constant 0 : index
    %66 = vector.load %arg16[%c0_41, %c0_42] : memref<16x1xf32, #tpu.memory_space<vmem>>, vector<16x1xf32>
    tpu.vector_store %arg16[%c0_41, %c0_42], %44 {strides = array<i32>} : memref<16x1xf32, #tpu.memory_space<vmem>>, vector<16x1xf32>,
    %c0_i32_43 = arith.constant 0 : i32
    %67 = arith.cmpi eq, %arg1, %c0_i32_43 : i32
    %68 = arith.extui %67 : i1 to i32
    %c0_i32_44 = arith.constant 0 : i32
    %69 = arith.cmpi ne, %68, %c0_i32_44 : i32
    scf.if %69 {
      %c0_45 = arith.constant 0 : index
      %c0_46 = arith.constant 0 : index
      %70 = vector.load %arg17[%c0_45, %c0_46] : memref<16x1xf32, #tpu.memory_space<vmem>>, vector<16x1xf32>
      %cst_47 = arith.constant 1.000000e-30 : f32
      %71 = vector.broadcast %cst_47 : f32 to vector<16x1xf32>
      %72 = arith.maximumf %70, %71 : vector<16x1xf32>
      %73 = tpu.reciprocal %72 {approx = true} : vector<16x1xf32> -> vector<16x1xf32>
      %c0_48 = arith.constant 0 : index
      %c0_49 = arith.constant 0 : index
      %74 = vector.load %arg18[%c0_48, %c0_49] : memref<16x128xf32, #tpu.memory_space<vmem>>, vector<16x128xf32>
      %75 = vector.broadcast %73 : vector<16x1xf32> to vector<16x128xf32>
      %76 = arith.mulf %74, %75 : vector<16x128xf32>
      %77 = arith.truncf %76 : vector<16x128xf32> to vector<16x128xbf16>
      %c0_50 = arith.constant 0 : index
      %c0_51 = arith.constant 0 : index
      %78 = vector.load %arg12[%c0_50, %c0_51] : memref<128x128xbf16, #tpu.memory_space<vmem>>, vector<128x128xbf16>
      %cst_52 = arith.constant dense<0.000000e+00> : vector<16x128xf32>
      %79 = tpu.matmul %77, %78, %cst_52 {dimension_numbers = #tpu.dot_dimension_numbers<[1], [0], [0], [1], [0, 0, 1, 1], [], []>} : vector<16x128xbf16>, vector<128x128xbf16>, vector<16x128xf32> -> vector<16x128xf32>
      %c0_53 = arith.constant 0 : index
      %c0_54 = arith.constant 0 : index
      %c0_55 = arith.constant 0 : index
      %80 = vector.load %arg14[%c0_53, %c0_54, %c0_55] : memref<1x16x128xf32, #tpu.memory_space<vmem>>, vector<1x16x128xf32>
      %81 = vector.shape_cast %80 : vector<1x16x128xf32> to vector<16x128xf32>
      %82 = vector.shape_cast %79 : vector<16x128xf32> to vector<1x16x128xf32>
      tpu.vector_store %arg14[%c0_53, %c0_54, %c0_55], %82 {strides = array<i32>} : memref<1x16x128xf32, #tpu.memory_space<vmem>>, vector<1x16x128xf32>,
    } else {
    }
    return
  }
  func.func @transform_0(%arg0: i32, %arg1: i32, %arg2: memref<2xi32, #tpu.memory_space<smem>>) -> (i32, i32, i32) {
    %c0_i32 = arith.constant 0 : i32
    %c0_i32_0 = arith.constant 0 : i32
    return %arg0, %arg1, %c0_i32 : i32, i32, i32
  }
  func.func @transform_1(%arg0: i32, %arg1: i32, %arg2: memref<2xi32, #tpu.memory_space<smem>>) -> (i32, i32, i32) {
    %c0_i32 = arith.constant 0 : i32
    %c0_i32_0 = arith.constant 0 : i32
    %c0_i32_1 = arith.constant 0 : i32
    return %arg0, %c0_i32, %c0_i32_0 : i32, i32, i32
  }
  func.func @transform_2(%arg0: i32, %arg1: i32, %arg2: memref<2xi32, #tpu.memory_space<smem>>) -> (i32, i32) {
    %c0_i32 = arith.constant 0 : i32
    %c0_i32_0 = arith.constant 0 : i32
    %c0_i32_1 = arith.constant 0 : i32
    return %c0_i32, %c0_i32_0 : i32, i32
  }
  func.func @transform_3(%arg0: i32, %arg1: i32, %arg2: memref<2xi32, #tpu.memory_space<smem>>) -> (i32, i32) {
    %c0_i32 = arith.constant 0 : i32
    %c0_i32_0 = arith.constant 0 : i32
    %c0_i32_1 = arith.constant 0 : i32
    return %c0_i32, %c0_i32_0 : i32, i32
  }
  func.func @transform_4(%arg0: i32, %arg1: i32, %arg2: memref<2xi32, #tpu.memory_space<smem>>) -> (i32, i32) {
    %c0_i32 = arith.constant 0 : i32
    %c0_i32_0 = arith.constant 0 : i32
    %c0_i32_1 = arith.constant 0 : i32
    return %c0_i32, %c0_i32_0 : i32, i32
  }
  func.func @transform_5(%arg0: i32, %arg1: i32, %arg2: memref<2xi32, #tpu.memory_space<smem>>) -> (i32, i32) {
    %c0_i32 = arith.constant 0 : i32
    %c0_i32_0 = arith.constant 0 : i32
    %c0_i32_1 = arith.constant 0 : i32
    return %c0_i32, %c0_i32_0 : i32, i32
  }
  func.func @transform_6(%arg0: i32, %arg1: i32, %arg2: memref<2xi32, #tpu.memory_space<smem>>) -> (i32, i32) {
    %c0_i32 = arith.constant 0 : i32
    %c0_i32_0 = arith.constant 0 : i32
    %c0_i32_1 = arith.constant 0 : i32
    return %c0_i32, %c0_i32_0 : i32, i32
  }
  func.func @transform_7(%arg0: i32, %arg1: i32, %arg2: memref<2xi32, #tpu.memory_space<smem>>) -> (i32, i32) {
    %c0_i32 = arith.constant 0 : i32
    %c0_i32_0 = arith.constant 0 : i32
    %c0_i32_1 = arith.constant 0 : i32
    return %c0_i32, %c0_i32_0 : i32, i32
  }
  func.func @transform_8(%arg0: i32, %arg1: i32, %arg2: memref<2xi32, #tpu.memory_space<smem>>) -> (i32, i32) {
    %c0_i32 = arith.constant 0 : i32
    %c0_i32_0 = arith.constant 0 : i32
    %c0_i32_1 = arith.constant 0 : i32
    return %c0_i32, %c0_i32_0 : i32, i32
  }
  func.func @transform_9(%arg0: i32, %arg1: i32, %arg2: memref<2xi32, #tpu.memory_space<smem>>) -> (i32, i32) {
    %c0_i32 = arith.constant 0 : i32
    %c0_i32_0 = arith.constant 0 : i32
    %c0_i32_1 = arith.constant 0 : i32
    return %c0_i32, %c0_i32_0 : i32, i32
  }
  func.func @transform_10(%arg0: i32, %arg1: i32, %arg2: memref<2xi32, #tpu.memory_space<smem>>) -> (i32, i32, i32) {
    %c0_i32 = arith.constant 0 : i32
    %c0_i32_0 = arith.constant 0 : i32
    return %arg0, %arg1, %c0_i32 : i32, i32, i32
  }
  func.func @transform_11(%arg0: i32, %arg1: i32, %arg2: memref<2xi32, #tpu.memory_space<smem>>) -> (i32, i32, i32) {
    %c0_i32 = arith.constant 0 : i32
    %c0_i32_0 = arith.constant 0 : i32
    %c0_i32_1 = arith.constant 0 : i32
    return %arg0, %c0_i32, %c0_i32_0 : i32, i32, i32
  }
}

</mosaic_0001>

<llo_original>
// kernel: asr_forward.1
$region0: #{asr_forward.1}
  #allocation0 [shape = 'u32[]', space=smem, size = 0x4, offset = 0x4, fixed_abs, tag = 'smem constant byte address 0x4 - core index']
  #allocation1 [shape = 'u32[144,128]{1,0:T(1,128)}', space=vmem, size = 0x12000, scoped, tag = 'internal scratch']
  #allocation2 [shape = 'bf16[16,128]{1,0:T(16,128)(2,1)}', space=vmem, size = 0x1000, scoped, tag = 'scratch operand']
  #allocation3 [shape = 'f32[16,1]{1,0:T(8,128)}', space=vmem, size = 0x2000, scoped, tag = 'scratch operand']
  #allocation4 [shape = 'f32[16,1]{1,0:T(8,128)}', space=vmem, size = 0x2000, scoped, tag = 'scratch operand']
  #allocation5 [shape = 'f32[16,128]{1,0:T(8,128)}', space=vmem, size = 0x2000, scoped, tag = 'scratch operand']
  #allocation6 [shape = 's32[1]{0}', space=sflag, size = 0x4, scoped, tag = 'scoped memory for asr_forward.1']
  #allocation7 [shape = 'u8[512]{0}', space=smem, size = 0x200, scoped, tag = 'prefetched SMEM operand 0']
  %s0 = inlined_call_operand.vmem [shape: s32[2], index: 0, kind: input, shape index: {}]
  %s1 = inlined_call_operand.vmem [shape: bf16[2,16,40], index: 1, kind: input, shape index: {}]
  %s2 = inlined_call_operand.vmem [shape: bf16[2,16,16], index: 2, kind: input, shape index: {}]
  %s3 = inlined_call_operand.vmem [shape: bf16[40,256], index: 3, kind: input, shape index: {}]
  %s4 = inlined_call_operand.hbm [shape: f32[1,256], index: 4, kind: input, shape index: {}]
  %s5 = inlined_call_operand.hbm [shape: bf16[256,128], index: 5, kind: input, shape index: {}]
  %s6 = inlined_call_operand.hbm [shape: f32[1,128], index: 6, kind: input, shape index: {}]
  %s7 = inlined_call_operand.vmem [shape: bf16[128,128], index: 7, kind: input, shape index: {}]
  %s8 = inlined_call_operand.vmem [shape: bf16[16,128], index: 8, kind: input, shape index: {}]
  %s9 = inlined_call_operand.hbm [shape: f32[1,128], index: 9, kind: input, shape index: {}]
  %s10 = inlined_call_operand.hbm [shape: bf16[128,128], index: 10, kind: input, shape index: {}]
  %s11 = inlined_call_operand.vmem [shape: bf16[2,16,128], index: 11, kind: output, shape index: {0}]
  %s12 = inlined_call_operand.vmem [shape: f32[2,16,128], index: 12, kind: output, shape index: {1}]
  %13 = xla_tuple %s11, %s12
  %s14 = sld [smem:[#allocation0]]
  $region109: #{asr_forward.1} parent=0
    _
  %s16 = ssub.s32 1, %s14
  %s17 = scalar_select 0, %s16, %s14
  %s18 = sshll.u32 %s0, 4
  %s19 = int_to_ptr.vmem [resolvable:$true] %s18
  %21 = dma.vmem_to_smem %s19, 16, [#allocation7], [#allocation6]
  %22 = dma.done [#allocation6], 16
  %23 = sfence
  $region1: #{asr_forward.1} parent=0
    #allocation8 [shape = 'u8[1024]{0}', space=vmem, size = 0x400, scoped, tag = 'input window, operand 4, single buffered']
    #allocation9 [shape = 's32[2]{0}', space=sflag, size = 0x8, scoped, tag = 'scoped memory for asr_forward.1']
    #allocation10 [shape = 'u8[65536]{0}', space=vmem, size = 0x10000, scoped, tag = 'input window, operand 5, single buffered']
    #allocation11 [shape = 's32[1]{0}', space=sflag, size = 0x4, scoped, tag = 'scoped memory for asr_forward.1']
    #allocation12 [shape = 'u8[512]{0}', space=vmem, size = 0x400, scoped, tag = 'input window, operand 6, single buffered']
    #allocation13 [shape = 'u8[512]{0}', space=vmem, size = 0x400, scoped, tag = 'input window, operand 9, single buffered']
    #allocation14 [shape = 's32[1]{0}', space=sflag, size = 0x4, scoped, tag = 'scoped memory for asr_forward.1']
    #allocation15 [shape = 'u8[32768]{0}', space=vmem, size = 0x8000, scoped, tag = 'input window, operand 10, single buffered']
    %24 = vsyncpa [#allocation9], 0
    %25 = vsyncpa [#allocation11], 0
    %26 = vsyncpa [#allocation14], 0
    loop: start=0, step=1, limit=4
    $region2: #{asr_forward.1} parent=1 // loop_pre_header
      _
    $region3: #{asr_forward.1} parent=1 // loop_header
      %s28 = sphi 0, %s32
      %p29 = scmp.ge.s32.totalorder %s28, 4
      %s35 = sphi 0, %s47
      %s36 = sphi 0, %s43
      %s37 = sphi 0, %s35
      %s38 = sphi 0, %s36
      %s39 = sphi 0, %s37
      %s40 = sphi 0, %s38
      %s52 = sphi 0, %s54
      %s55 = sphi 0, %s52
      %s56 = sphi 0, %s55
      %s72 = sphi 0, %s56
      %s78 = sphi 0, %s80
      %s81 = sphi 0, %s78
      %s82 = sphi 0, %s81
      %s98 = sphi 0, %s82
      %s102 = sphi 0, %s102
      %s104 = sphi 0, %s102
      %s105 = sphi 0, %s104
      %s119 = sphi 0, %s105
      %s123 = sphi 0, %s123
      %s125 = sphi 0, %s123
      %s126 = sphi 0, %s125
      %s140 = sphi 0, %s126
      %s144 = sphi 0, %s144
      %s146 = sphi 0, %s144
      %s147 = sphi 0, %s146
      %s161 = sphi 0, %s147
      %s165 = sphi 0, %s165
      %s167 = sphi 0, %s165
      %s168 = sphi 0, %s167
      %s182 = sphi 0, %s168
      %s186 = sphi 0, %s186
      %s188 = sphi 0, %s186
      %s189 = sphi 0, %s188
      %s203 = sphi 0, %s189
      %s207 = sphi 0, %s207
      %s209 = sphi 0, %s207
      %s210 = sphi 0, %s209
      %s224 = sphi 0, %s210
      %s228 = sphi 0, %s228
      %s230 = sphi 0, %s228
      %s231 = sphi 0, %s230
      %s245 = sphi 0, %s231
      %s249 = sphi 0, %s249
      %s251 = sphi 0, %s249
      %s252 = sphi 0, %s251
      %s266 = sphi 0, %s252
      %s274 = sphi 0, %s276
      %s277 = sphi 0, %s274
      %s278 = sphi 0, %s277
      %s294 = sphi 0, %s278
      %s300 = sphi 0, %s302
      %s303 = sphi 0, %s300
      %s304 = sphi 0, %s303
      %s320 = sphi 0, %s304
    $region4: #{asr_forward.1} parent=1 // loop_header_branch
      %31 = sbr.rel (%p29) target = $region8
    $region5: #{asr_forward.1} parent=1 // loop_body
      %s33 = ssub.s32 %s28, 1
      %s34 = ssub.s32 %s28, 2
      %s41 = sadd.s32 1, %s36
      %p42 = scmp.ge.s32.totalorder %s41, 1
      %s43 = scalar_select %p42, 0, %s41
      %s44 = sadd.s32 1, %s35
      %s45 = scalar_select %p42, %s44, %s35
      %p46 = scmp.ge.s32.totalorder %s45, 2
      %s47 = scalar_select %p46, 0, %s45
      %s48 = ssub.s32 %s35, %s47
      %s49 = ssub.s32 %s36, %s43
      %s50 = sor.u32 %s48, %s49
      %p51 = scmp.eq.s32.totalorder %s50, 0
      %s53 = sadd.s32 %s52, 1
      %s54 = scalar_select %p51, %s52, %s53
      %p57 = pneg %p51
      %p58 = scmp.eq.s32.totalorder %s28, 1
      %p59 = por %p57, %p58
      %p60 = scmp.ne.s32.totalorder %s52, %s55
      %p61 = scmp.eq.s32.totalorder %s28, 0
      %p62 = por %p60, %p61
      %p63 = scmp.ne.s32.totalorder %s52, %s55
      %p64 = scmp.eq.s32.totalorder %s33, 1
      %p65 = por %p63, %p64
      %p66 = scmp.ne.s32.totalorder %s55, %s56
      %p67 = scmp.eq.s32.totalorder %s33, 0
      %p68 = por %p66, %p67
      %p69 = scmp.ne.s32.totalorder %s55, %s56
      %p70 = scmp.eq.s32.totalorder %s34, 1
      %p71 = por %p69, %p70
      %p73 = scmp.ne.s32.totalorder %s56, %s72
      %p74 = scmp.eq.s32.totalorder %s34, 0
      %p75 = por %p73, %p74
      %s76 = ssub.s32 %s35, %s47
      %p77 = scmp.eq.s32.totalorder %s76, 0
      %s79 = sadd.s32 %s78, 1
      %s80 = scalar_select %p77, %s78, %s79
      %p83 = pneg %p77
      %p84 = scmp.eq.s32.totalorder %s28, 1
      %p85 = por %p83, %p84
      %p86 = scmp.ne.s32.totalorder %s78, %s81
      %p87 = scmp.eq.s32.totalorder %s28, 0
      %p88 = por %p86, %p87
      %p89 = scmp.ne.s32.totalorder %s78, %s81
      %p90 = scmp.eq.s32.totalorder %s33, 1
      %p91 = por %p89, %p90
      %p92 = scmp.ne.s32.totalorder %s81, %s82
      %p93 = scmp.eq.s32.totalorder %s33, 0
      %p94 = por %p92, %p93
      %p95 = scmp.ne.s32.totalorder %s81, %s82
      %p96 = scmp.eq.s32.totalorder %s34, 1
      %p97 = por %p95, %p96
      %p99 = scmp.ne.s32.totalorder %s82, %s98
      %p100 = scmp.eq.s32.totalorder %s34, 0
      %p101 = por %p99, %p100
      %s103 = sadd.s32 %s102, 1
      %p106 = scmp.eq.s32.totalorder %s28, 1
      %p107 = scmp.ne.s32.totalorder %s102, %s104
      %p108 = scmp.eq.s32.totalorder %s28, 0
      %p109 = por %p107, %p108
      %p110 = scmp.ne.s32.totalorder %s102, %s104
      %p111 = scmp.eq.s32.totalorder %s33, 1
      %p112 = por %p110, %p111
      %p113 = scmp.ne.s32.totalorder %s104, %s105
      %p114 = scmp.eq.s32.totalorder %s33, 0
      %p115 = por %p113, %p114
      %p116 = scmp.ne.s32.totalorder %s104, %s105
      %p117 = scmp.eq.s32.totalorder %s34, 1
      %p118 = por %p116, %p117
      %p120 = scmp.ne.s32.totalorder %s105, %s119
      %p121 = scmp.eq.s32.totalorder %s34, 0
      %p122 = por %p120, %p121
      %s124 = sadd.s32 %s123, 1
      %p127 = scmp.eq.s32.totalorder %s28, 1
      %p128 = scmp.ne.s32.totalorder %s123, %s125
      %p129 = scmp.eq.s32.totalorder %s28, 0
      %p130 = por %p128, %p129
      %p131 = scmp.ne.s32.totalorder %s123, %s125
      %p132 = scmp.eq.s32.totalorder %s33, 1
      %p133 = por %p131, %p132
      %p134 = scmp.ne.s32.totalorder %s125, %s126
      %p135 = scmp.eq.s32.totalorder %s33, 0
      %p136 = por %p134, %p135
      %p137 = scmp.ne.s32.totalorder %s125, %s126
      %p138 = scmp.eq.s32.totalorder %s34, 1
      %p139 = por %p137, %p138
      %p141 = scmp.ne.s32.totalorder %s126, %s140
      %p142 = scmp.eq.s32.totalorder %s34, 0
      %p143 = por %p141, %p142
      %s145 = sadd.s32 %s144, 1
      %p148 = scmp.eq.s32.totalorder %s28, 1
      %p149 = scmp.ne.s32.totalorder %s144, %s146
      %p150 = scmp.eq.s32.totalorder %s28, 0
      %p151 = por %p149, %p150
      %p152 = scmp.ne.s32.totalorder %s144, %s146
      %p153 = scmp.eq.s32.totalorder %s33, 1
      %p154 = por %p152, %p153
      %p155 = scmp.ne.s32.totalorder %s146, %s147
      %p156 = scmp.eq.s32.totalorder %s33, 0
      %p157 = por %p155, %p156
      %p158 = scmp.ne.s32.totalorder %s146, %s147
      %p159 = scmp.eq.s32.totalorder %s34, 1
      %p160 = por %p158, %p159
      %p162 = scmp.ne.s32.totalorder %s147, %s161
      %p163 = scmp.eq.s32.totalorder %s34, 0
      %p164 = por %p162, %p163
      %s166 = sadd.s32 %s165, 1
      %p169 = scmp.eq.s32.totalorder %s28, 1
      %p170 = scmp.ne.s32.totalorder %s165, %s167
      %p171 = scmp.eq.s32.totalorder %s28, 0
      %p172 = por %p170, %p171
      %p173 = scmp.ne.s32.totalorder %s165, %s167
      %p174 = scmp.eq.s32.totalorder %s33, 1
      %p175 = por %p173, %p174
      %p176 = scmp.ne.s32.totalorder %s167, %s168
      %p177 = scmp.eq.s32.totalorder %s33, 0
      %p178 = por %p176, %p177
      %p179 = scmp.ne.s32.totalorder %s167, %s168
      %p180 = scmp.eq.s32.totalorder %s34, 1
      %p181 = por %p179, %p180
      %p183 = scmp.ne.s32.totalorder %s168, %s182
      %p184 = scmp.eq.s32.totalorder %s34, 0
      %p185 = por %p183, %p184
      %s187 = sadd.s32 %s186, 1
      %p190 = scmp.eq.s32.totalorder %s28, 1
      %p191 = scmp.ne.s32.totalorder %s186, %s188
      %p192 = scmp.eq.s32.totalorder %s28, 0
      %p193 = por %p191, %p192
      %p194 = scmp.ne.s32.totalorder %s186, %s188
      %p195 = scmp.eq.s32.totalorder %s33, 1
      %p196 = por %p194, %p195
      %p197 = scmp.ne.s32.totalorder %s188, %s189
      %p198 = scmp.eq.s32.totalorder %s33, 0
      %p199 = por %p197, %p198
      %p200 = scmp.ne.s32.totalorder %s188, %s189
      %p201 = scmp.eq.s32.totalorder %s34, 1
      %p202 = por %p200, %p201
      %p204 = scmp.ne.s32.totalorder %s189, %s203
      %p205 = scmp.eq.s32.totalorder %s34, 0
      %p206 = por %p204, %p205
      %s208 = sadd.s32 %s207, 1
      %p211 = scmp.eq.s32.totalorder %s28, 1
      %p212 = scmp.ne.s32.totalorder %s207, %s209
      %p213 = scmp.eq.s32.totalorder %s28, 0
      %p214 = por %p212, %p213
      %p215 = scmp.ne.s32.totalorder %s207, %s209
      %p216 = scmp.eq.s32.totalorder %s33, 1
      %p217 = por %p215, %p216
      %p218 = scmp.ne.s32.totalorder %s209, %s210
      %p219 = scmp.eq.s32.totalorder %s33, 0
      %p220 = por %p218, %p219
      %p221 = scmp.ne.s32.totalorder %s209, %s210
      %p222 = scmp.eq.s32.totalorder %s34, 1
      %p223 = por %p221, %p222
      %p225 = scmp.ne.s32.totalorder %s210, %s224
      %p226 = scmp.eq.s32.totalorder %s34, 0
      %p227 = por %p225, %p226
      %s229 = sadd.s32 %s228, 1
      %p232 = scmp.eq.s32.totalorder %s28, 1
      %p233 = scmp.ne.s32.totalorder %s228, %s230
      %p234 = scmp.eq.s32.totalorder %s28, 0
      %p235 = por %p233, %p234
      %p236 = scmp.ne.s32.totalorder %s228, %s230
      %p237 = scmp.eq.s32.totalorder %s33, 1
      %p238 = por %p236, %p237
      %p239 = scmp.ne.s32.totalorder %s230, %s231
      %p240 = scmp.eq.s32.totalorder %s33, 0
      %p241 = por %p239, %p240
      %p242 = scmp.ne.s32.totalorder %s230, %s231
      %p243 = scmp.eq.s32.totalorder %s34, 1
      %p244 = por %p242, %p243
      %p246 = scmp.ne.s32.totalorder %s231, %s245
      %p247 = scmp.eq.s32.totalorder %s34, 0
      %p248 = por %p246, %p247
      %s250 = sadd.s32 %s249, 1
      %p253 = scmp.eq.s32.totalorder %s28, 1
      %p254 = scmp.ne.s32.totalorder %s249, %s251
      %p255 = scmp.eq.s32.totalorder %s28, 0
      %p256 = por %p254, %p255
      %p257 = scmp.ne.s32.totalorder %s249, %s251
      %p258 = scmp.eq.s32.totalorder %s33, 1
      %p259 = por %p257, %p258
      %p260 = scmp.ne.s32.totalorder %s251, %s252
      %p261 = scmp.eq.s32.totalorder %s33, 0
      %p262 = por %p260, %p261
      %p263 = scmp.ne.s32.totalorder %s251, %s252
      %p264 = scmp.eq.s32.totalorder %s34, 1
      %p265 = por %p263, %p264
      %p267 = scmp.ne.s32.totalorder %s252, %s266
      %p268 = scmp.eq.s32.totalorder %s34, 0
      %p269 = por %p267, %p268
      %s270 = ssub.s32 %s35, %s47
      %s271 = ssub.s32 %s36, %s43
      %s272 = sor.u32 %s270, %s271
      %p273 = scmp.eq.s32.totalorder %s272, 0
      %s275 = sadd.s32 %s274, 1
      %s276 = scalar_select %p273, %s274, %s275
      %p279 = pneg %p273
      %p280 = scmp.eq.s32.totalorder %s28, 1
      %p281 = por %p279, %p280
      %p282 = scmp.ne.s32.totalorder %s274, %s277
      %p283 = scmp.eq.s32.totalorder %s28, 0
      %p284 = por %p282, %p283
      %p285 = scmp.ne.s32.totalorder %s274, %s277
      %p286 = scmp.eq.s32.totalorder %s33, 1
      %p287 = por %p285, %p286
      %p288 = scmp.ne.s32.totalorder %s277, %s278
      %p289 = scmp.eq.s32.totalorder %s33, 0
      %p290 = por %p288, %p289
      %p291 = scmp.ne.s32.totalorder %s277, %s278
      %p292 = scmp.eq.s32.totalorder %s34, 1
      %p293 = por %p291, %p292
      %p295 = scmp.ne.s32.totalorder %s278, %s294
      %p296 = scmp.eq.s32.totalorder %s34, 0
      %p297 = por %p295, %p296
      %s298 = ssub.s32 %s35, %s47
      %p299 = scmp.eq.s32.totalorder %s298, 0
      %s301 = sadd.s32 %s300, 1
      %s302 = scalar_select %p299, %s300, %s301
      %p305 = pneg %p299
      %p306 = scmp.eq.s32.totalorder %s28, 1
      %p307 = por %p305, %p306
      %p308 = scmp.ne.s32.totalorder %s300, %s303
      %p309 = scmp.eq.s32.totalorder %s28, 0
      %p310 = por %p308, %p309
      %p311 = scmp.ne.s32.totalorder %s300, %s303
      %p312 = scmp.eq.s32.totalorder %s33, 1
      %p313 = por %p311, %p312
      %p314 = scmp.ne.s32.totalorder %s303, %s304
      %p315 = scmp.eq.s32.totalorder %s33, 0
      %p316 = por %p314, %p315
      %p317 = scmp.ne.s32.totalorder %s303, %s304
      %p318 = scmp.eq.s32.totalorder %s34, 1
      %p319 = por %p317, %p318
      %p321 = scmp.ne.s32.totalorder %s304, %s320
      %p322 = scmp.eq.s32.totalorder %s34, 0
      %p323 = por %p321, %p322
      %p324 = scmp.le.s32.totalorder 1, %s28
      %p325 = scmp.lt.s32.totalorder %s28, 3
      %p326 = pnand %p324, %p325
      %p327 = pneg %p326
      // Predicated region
      $region9: #{asr_forward.1} parent=5 // pred_check
        _
      $region10: #{asr_forward.1} parent=5 // pred_check_branch
        %329 = sbr.rel (%p326) target = $region12
      $region11: #{asr_forward.1} parent=5 // pred_region
        %s330 = ssub.s32 %s28, 1
        // Predicated region
        $region13: #{asr_forward.1} parent=11 // pred_check
          %p331 = pneg %p115
        $region14: #{asr_forward.1} parent=11 // pred_check_branch
          %333 = sbr.rel (%p331) target = $region16
        $region15: #{asr_forward.1} parent=11 // pred_region
          _
        $region16: #{asr_forward.1} parent=11 // pred_fallthru
          _
        // Predicated region
        $region17: #{asr_forward.1} parent=11 // pred_check
          %p334 = pneg %p136
        $region18: #{asr_forward.1} parent=11 // pred_check_branch
          %336 = sbr.rel (%p334) target = $region20
        $region19: #{asr_forward.1} parent=11 // pred_region
          %s338 = ssub.s32 32, 32
          %339 = vsyncadd [#allocation9], %s338
          %s341 = sshll.u32 [#allocation8], 4
          %s342 = int_to_ptr.vmem [resolvable:$true] %s341
          %344 = dma.hbm_to_vmem [thread:$0]  %s4, 32, %s342, [#allocation9]
        $region20: #{asr_forward.1} parent=11 // pred_fallthru
          _
        // Predicated region
        $region21: #{asr_forward.1} parent=11 // pred_check
          %p345 = pneg %p157
        $region22: #{asr_forward.1} parent=11 // pred_check_branch
          %347 = sbr.rel (%p345) target = $region24
        $region23: #{asr_forward.1} parent=11 // pred_region
          %s349 = ssub.s32 2048, 2048
          %350 = vsyncadd [#allocation11], %s349
          %s351 = sshll.u32 [#allocation10], 4
          %s352 = int_to_ptr.vmem [resolvable:$true] %s351
          %357 = dma.hbm_to_vmem [thread:$0]  %s5, 2048, %s352, [#allocation11], 64, 64, 4
        $region24: #{asr_forward.1} parent=11 // pred_fallthru
          _
        // Predicated region
        $region25: #{asr_forward.1} parent=11 // pred_check
          %p358 = pneg %p178
        $region26: #{asr_forward.1} parent=11 // pred_check_branch
          %360 = sbr.rel (%p358) target = $region28
        $region27: #{asr_forward.1} parent=11 // pred_region
          %s362 = ssub.s32 16, 16
          %363 = vsyncadd [#allocation11], %s362
          %s365 = sshll.u32 [#allocation12], 4
          %s366 = int_to_ptr.vmem [resolvable:$true] %s365
          %368 = dma.hbm_to_vmem [thread:$0]  %s6, 16, %s366, [#allocation11]
        $region28: #{asr_forward.1} parent=11 // pred_fallthru
          _
        // Predicated region
        $region29: #{asr_forward.1} parent=11 // pred_check
          %p369 = pneg %p199
        $region30: #{asr_forward.1} parent=11 // pred_check_branch
          %371 = sbr.rel (%p369) target = $region32
        $region31: #{asr_forward.1} parent=11 // pred_region
          _
        $region32: #{asr_forward.1} parent=11 // pred_fallthru
          _
        // Predicated region
        $region33: #{asr_forward.1} parent=11 // pred_check
          %p372 = pneg %p220
        $region34: #{asr_forward.1} parent=11 // pred_check_branch
          %374 = sbr.rel (%p372) target = $region36
        $region35: #{asr_forward.1} parent=11 // pred_region
          _
        $region36: #{asr_forward.1} parent=11 // pred_fallthru
          _
        // Predicated region
        $region37: #{asr_forward.1} parent=11 // pred_check
          %p375 = pneg %p241
        $region38: #{asr_forward.1} parent=11 // pred_check_branch
          %377 = sbr.rel (%p375) target = $region40
        $region39: #{asr_forward.1} parent=11 // pred_region
          %s379 = ssub.s32 16, 16
          %380 = vsyncadd [#allocation14], %s379
          %s382 = sshll.u32 [#allocation13], 4
          %s383 = int_to_ptr.vmem [resolvable:$true] %s382
          %385 = dma.hbm_to_vmem [thread:$0]  %s9, 16, %s383, [#allocation14]
        $region40: #{asr_forward.1} parent=11 // pred_fallthru
          _
        // Predicated region
        $region41: #{asr_forward.1} parent=11 // pred_check
          %p386 = pneg %p262
        $region42: #{asr_forward.1} parent=11 // pred_check_branch
          %388 = sbr.rel (%p386) target = $region44
        $region43: #{asr_forward.1} parent=11 // pred_region
          %s390 = ssub.s32 1024, 1024
          %391 = vsyncadd [#allocation14], %s390
          %s392 = sshll.u32 [#allocation15], 4
          %s393 = int_to_ptr.vmem [resolvable:$true] %s392
          %398 = dma.hbm_to_vmem [thread:$0]  %s10, 1024, %s393, [#allocation14], 64, 64, 4
        $region44: #{asr_forward.1} parent=11 // pred_fallthru
          _
      $region12: #{asr_forward.1} parent=5 // pred_fallthru
        _
      %p399 = scmp.lt.s32.totalorder %s28, 2
      // Predicated region
      $region45: #{asr_forward.1} parent=5 // pred_check
        %p400 = pneg %p399
      $region46: #{asr_forward.1} parent=5 // pred_check_branch
        %402 = sbr.rel (%p400) target = $region48
      $region47: #{asr_forward.1} parent=5 // pred_region
        // Predicated region
        $region49: #{asr_forward.1} parent=47 // pred_check
          %p403 = pneg %p62
        $region50: #{asr_forward.1} parent=47 // pred_check_branch
          %405 = sbr.rel (%p403) target = $region52
        $region51: #{asr_forward.1} parent=47 // pred_region
          %s406 = smul.u32 2, %s36
          %p407 = scmp.lt.s32.totalorder %s35, 1
          %s408 = scalar_select %p407, %s35, 1
          %p409 = scmp.lt.s32.totalorder %s406, 1
          %s410 = scalar_select %p409, %s406, 1
          %s411 = smul.addr %s408, 2
          %s412 = sadd.s32 %s410, %s411
          %s413 = smul.addr %s412, 4
          %s414 = scalar_lea.vmem %s1, %s413
          %s415 = smul.u32 2, %s36
        $region52: #{asr_forward.1} parent=47 // pred_fallthru
          _
        // Predicated region
        $region53: #{asr_forward.1} parent=47 // pred_check
          %p416 = pneg %p88
        $region54: #{asr_forward.1} parent=47 // pred_check_branch
          %418 = sbr.rel (%p416) target = $region56
        $region55: #{asr_forward.1} parent=47 // pred_region
          %p419 = scmp.lt.s32.totalorder %s35, 1
          %s420 = scalar_select %p419, %s35, 1
          %s421 = smul.addr %s420, 2
          %s422 = smul.addr %s421, 4
          %s423 = scalar_lea.vmem %s2, %s422
        $region56: #{asr_forward.1} parent=47 // pred_fallthru
          _
      $region48: #{asr_forward.1} parent=5 // pred_fallthru
        _
      %p424 = scmp.le.s32.totalorder 1, %s28
      %p425 = scmp.lt.s32.totalorder %s28, 3
      %p426 = pnand %p424, %p425
      %p427 = pneg %p426
      // Predicated region
      $region57: #{asr_forward.1} parent=5 // pred_check
        _
      $region58: #{asr_forward.1} parent=5 // pred_check_branch
        %429 = sbr.rel (%p426) target = $region60
      $region59: #{asr_forward.1} parent=5 // pred_region
        %s430 = ssub.s32 %s28, 1
        // Predicated region
        $region61: #{asr_forward.1} parent=59 // pred_check
          %p431 = pneg %p136
        $region62: #{asr_forward.1} parent=59 // pred_check_branch
          %433 = sbr.rel (%p431) target = $region64
        $region63: #{asr_forward.1} parent=59 // pred_region
          %434 = dma.done [#allocation9], 32
        $region64: #{asr_forward.1} parent=59 // pred_fallthru
          _
        // Predicated region
        $region65: #{asr_forward.1} parent=59 // pred_check
          %p435 = pneg %p157
        $region66: #{asr_forward.1} parent=59 // pred_check_branch
          %437 = sbr.rel (%p435) target = $region68
        $region67: #{asr_forward.1} parent=59 // pred_region
          %438 = dma.done [#allocation11], 2048
        $region68: #{asr_forward.1} parent=59 // pred_fallthru
          _
        // Predicated region
        $region69: #{asr_forward.1} parent=59 // pred_check
          %p439 = pneg %p178
        $region70: #{asr_forward.1} parent=59 // pred_check_branch
          %441 = sbr.rel (%p439) target = $region72
        $region71: #{asr_forward.1} parent=59 // pred_region
          %442 = dma.done [#allocation11], 16
        $region72: #{asr_forward.1} parent=59 // pred_fallthru
          _
        // Predicated region
        $region73: #{asr_forward.1} parent=59 // pred_check
          %p443 = pneg %p241
        $region74: #{asr_forward.1} parent=59 // pred_check_branch
          %445 = sbr.rel (%p443) target = $region76
        $region75: #{asr_forward.1} parent=59 // pred_region
          %446 = dma.done [#allocation14], 16
        $region76: #{asr_forward.1} parent=59 // pred_fallthru
          _
        // Predicated region
        $region77: #{asr_forward.1} parent=59 // pred_check
          %p447 = pneg %p262
        $region78: #{asr_forward.1} parent=59 // pred_check_branch
          %449 = sbr.rel (%p447) target = $region80
        $region79: #{asr_forward.1} parent=59 // pred_region
          %450 = dma.done [#allocation14], 1024
        $region80: #{asr_forward.1} parent=59 // pred_fallthru
          _
        %s451 = smul.u32 2, %s38
        %p452 = scmp.lt.s32.totalorder %s37, 1
        %s453 = scalar_select %p452, %s37, 1
        %p454 = scmp.lt.s32.totalorder %s451, 1
        %s455 = scalar_select %p454, %s451, 1
        %s456 = smul.addr %s453, 2
        %s457 = sadd.s32 %s455, %s456
        %s458 = smul.addr %s457, 4
        %s459 = scalar_lea.vmem %s1, %s458
        %p460 = pneg %p68
        %p461 = pneg %p65
        %p462 = scmp.lt.s32.totalorder %s37, 1
        %s463 = scalar_select %p462, %s37, 1
        %s464 = smul.addr %s463, 2
        %s465 = smul.addr %s464, 4
        %s466 = scalar_lea.vmem %s2, %s465
        %p467 = pneg %p94
        %p468 = pneg %p91
        %p469 = pneg %p115
        %p470 = pneg %p112
        %p471 = pneg %p136
        %p472 = pneg %p133
        %p473 = pneg %p157
        %p474 = pneg %p154
        %p475 = pneg %p178
        %p476 = pneg %p175
        %p477 = pneg %p199
        %p478 = pneg %p196
        %p479 = pneg %p220
        %p480 = pneg %p217
        %p481 = pneg %p241
        %p482 = pneg %p238
        %p483 = pneg %p262
        %p484 = pneg %p259
        %p485 = pneg %p290
        %p486 = pneg %p287
        %s487 = smul.u32 2, %s38
        %p488 = scmp.lt.s32.totalorder %s37, 1
        %s489 = scalar_select %p488, %s37, 1
        %p490 = scmp.lt.s32.totalorder %s487, 1
        %s491 = scalar_select %p490, %s487, 1
        %s492 = smul.addr %s489, 2
        %s493 = sadd.s32 %s491, %s492
        %s494 = smul.addr %s493, 4
        %s495 = scalar_lea.vmem %s11, %s494
        %p496 = pneg %p316
        %p497 = pneg %p313
        %p498 = scmp.lt.s32.totalorder %s37, 1
        %s499 = scalar_select %p498, %s37, 1
        %s500 = smul.addr %s499, 2
        %s501 = smul.addr %s500, 8
        %s502 = scalar_lea.vmem %s12, %s501
        %s503 = smul.u32 2, %s38
        %p504 = scmp.lt.s32.totalorder %s37, 1
        %s505 = scalar_select %p504, %s37, 1
        %p506 = scmp.lt.s32.totalorder %s503, 1
        %s507 = scalar_select %p506, %s503, 1
        %s508 = smul.addr %s505, 2
        %s509 = sadd.s32 %s507, %s508
        %s510 = smul.addr %s509, 4
        %s511 = scalar_lea.vmem %s1, %s510
        %s512 = smul.u32 2, %s38
        %p513 = scmp.lt.s32.totalorder %s37, 1
        %s514 = scalar_select %p513, %s37, 1
        %s515 = smul.addr %s514, 2
        %s516 = smul.addr %s515, 4
        %s517 = scalar_lea.vmem %s2, %s516
        %s518 = smul.u32 2, %s38
        %p519 = scmp.lt.s32.totalorder %s37, 1
        %s520 = scalar_select %p519, %s37, 1
        %p521 = scmp.lt.s32.totalorder %s518, 1
        %s522 = scalar_select %p521, %s518, 1
        %s523 = smul.addr %s520, 2
        %s524 = sadd.s32 %s522, %s523
        %s525 = smul.addr %s524, 4
        %s526 = scalar_lea.vmem %s11, %s525
        %s527 = smul.u32 2, %s38
        %p528 = scmp.lt.s32.totalorder %s37, 1
        %s529 = scalar_select %p528, %s37, 1
        %s530 = smul.addr %s529, 2
        %s531 = smul.addr %s530, 8
        %s532 = scalar_lea.vmem %s12, %s531
        %p534 = scmp.eq.s32.totalorder %s38, 0
        // Predicated region
        $region81: #{asr_forward.1} parent=59 // pred_check
          %p535 = pneg %p534
        $region82: #{asr_forward.1} parent=59 // pred_check_branch
          %537 = sbr.rel (%p535) target = $region84
        $region83: #{asr_forward.1} parent=59 // pred_region
          %v538 = vld [vmem:[%s517] sm:$0xf]
          %v539 = vld [vmem:[%s517 + $0x4] sm:$0xf]
          %v540 = vld [vmem:[%s8] sm:$0xf]
          %v541 = vld [vmem:[%s8 + $0x4] sm:$0xf]
          %v542 = vld [vmem:[#allocation13] sm:$0x1]
          %v544 = vlaneseq
          %v545 = vshrl.u32 %v544, 7
          %v546 = vsub.s32 0, %v545
          %v547 = vrot.slane %v542, %v546
          %v551 = vunpack.c.l.b16 %v538
          %v552 = vunpack.c.l.b16 %v539
          %v553 = vpack.c.b16 %v552, %v551
          %v556 = vunpack.c.l.b16 %v540
          %v557 = vunpack.c.l.b16 %v541
          %v558 = vpack.c.b16 %v557, %v556
          %vm560 = vcmask 130048
          %v562 = vsel %vm560, %v553, 0
          %564 = vmatprep.subr.bf16.mxu0 0
          %565 = vmatpush1.bf16.msra.mxu0 %v558
          %566 = vmatprep.subr.bf16.mxu0 0
          %567 = vmatpush1.bf16.msra.mxu0 0
          %568 = vmatprep.subr.bf16.mxu0 0
          %569 = vmatpush1.bf16.msra.mxu0 0
          %570 = vmatprep.subr.bf16.mxu0 0
          %571 = vmatpush1.bf16.msra.mxu0 0
          %572 = vmatprep.subr.bf16.mxu0 0
          %573 = vmatpush1.bf16.msra.mxu0 0
          %574 = vmatprep.subr.bf16.mxu0 0
          %575 = vmatpush1.bf16.msra.mxu0 0
          %576 = vmatprep.subr.bf16.mxu0 0
          %577 = vmatpush1.bf16.msra.mxu0 0
          %578 = vmatprep.subr.bf16.mxu0 0
          %579 = vmatpush1.bf16.msra.mxu0 0
          %580 = vmatprep.subr.bf16.mxu0 0
          %581 = vmatpush1.bf16.msra.mxu0 0
          %582 = vmatprep.subr.bf16.mxu0 0
          %583 = vmatpush1.bf16.msra.mxu0 0
          %584 = vmatprep.subr.bf16.mxu0 0
          %585 = vmatpush1.bf16.msra.mxu0 0
          %586 = vmatprep.subr.bf16.mxu0 0
          %587 = vmatpush1.bf16.msra.mxu0 0
          %588 = vmatprep.subr.bf16.mxu0 0
          %589 = vmatpush1.bf16.msra.mxu0 0
          %590 = vmatprep.subr.bf16.mxu0 0
          %591 = vmatpush1.bf16.msra.mxu0 0
          %592 = vmatprep.subr.bf16.mxu0 0
          %593 = vmatpush1.bf16.msra.mxu0 0
          %594 = vmatprep.subr.bf16.mxu0 0
          %595 = vmatpush1.bf16.msra.mxu0 0
          %596 = vmatprep.mubr.bf16.mxu0 0
          %597 = vmatmul.mubr.bf16.gmra.mrb[0].mxu0 %v562
          %v598 = vpop.f32.mrb[0].mxu0
          %v599 = vadd.f32 %v547, %v598
          %v600 = vpop.f32.mrb[0].mxu0
          %v601 = vpop.f32.mrb[0].mxu0
          %v602 = vadd.f32 %v547, %v601
          %v603 = vpop.f32.mrb[0].mxu0
          %604 = vdwg.mxu0
          %v605 = vpack.c.bf16 %v602, %v599
          %606 = vst [vmem:[#allocation2] sm:$0xff] %v605
          %vm607 = vcmask 7168
          %608 = vst.msk [vmem:[#allocation3] sm:$0xff] %vm607, -1e+30
          %609 = vst.msk [vmem:[#allocation3 + $0x8] sm:$0xff] %vm607, -1e+30
          %610 = vst.msk [vmem:[#allocation4] sm:$0xff] %vm607, 0.0
          %611 = vst.msk [vmem:[#allocation4 + $0x8] sm:$0xff] %vm607, 0.0
          %612 = vst [vmem:[#allocation5] sm:$0xff] 0.0
          %613 = vst [vmem:[#allocation5 + $0x8] sm:$0xff] 0.0
        $region84: #{asr_forward.1} parent=59 // pred_fallthru
          _
        %v614 = vld [vmem:[%s511] sm:$0xf]
        %v615 = vld [vmem:[%s511 + $0x4] sm:$0xf]
        %v616 = vld [vmem:[%s3] sm:$0xff]
        %v617 = vld [vmem:[%s3 + $0x8] sm:$0xff]
        %v618 = vld [vmem:[%s3 + $0x10] sm:$0xff]
        %v619 = vld [vmem:[%s3 + $0x18] sm:$0xff]
        %v620 = vld [vmem:[%s3 + $0x20] sm:$0xff]
        %v621 = vld [vmem:[#allocation8] sm:$0x3]
        %v623 = vlaneseq
        %v624 = vshrl.u32 %v623, 7
        %v625 = vsub.s32 0, %v624
        %v626 = vrot.slane %v621, %v625
        %v627 = vlaneseq
        %v628 = vshrl.u32 %v627, 7
        %v629 = vsub.s32 1, %v628
        %v630 = vrot.slane %v621, %v629
        %v635 = vunpack.c.l.b16 %v614
        %v636 = vunpack.c.l.b16 %v615
        %v637 = vpack.c.b16 %v636, %v635
        %v643 = vunpack.c.l.b16 %v616
        %v644 = vunpack.c.h.b16 %v616
        %v645 = vunpack.c.l.b16 %v617
        %v646 = vunpack.c.h.b16 %v617
        %v647 = vunpack.c.l.b16 %v618
        %v648 = vunpack.c.h.b16 %v618
        %v649 = vunpack.c.l.b16 %v619
        %v650 = vunpack.c.h.b16 %v619
        %v651 = vunpack.c.l.b16 %v620
        %v652 = vunpack.c.h.b16 %v620
        %v653 = vpack.c.b16 %v645, %v643
        %v654 = vpack.c.b16 %v646, %v644
        %v655 = vpack.c.b16 %v649, %v647
        %v656 = vpack.c.b16 %v650, %v648
        %v657 = vpack.c.b16 %v651, %v651
        %v658 = vpack.c.b16 %v652, %v652
        %vm663 = vcmask 326656
        %v665 = vsel %vm663, %v637, 0
        %vm667 = vcmask 1043456
        %v669 = vsel %vm667, %v657, 0
        %v672 = vsel %vm667, %v658, 0
        %674 = vmatprep.subr.bf16.mxu0 %v654
        %675 = vmatpush1.bf16.msra.mxu0 %v653
        %676 = vmatprep.subr.bf16.mxu0 %v656
        %677 = vmatpush1.bf16.msra.mxu0 %v655
        %678 = vmatprep.subr.bf16.mxu0 %v672
        %679 = vmatpush1.bf16.msra.mxu0 %v669
        %680 = vmatprep.subr.bf16.mxu0 0
        %681 = vmatpush1.bf16.msra.mxu0 0
        %682 = vmatprep.subr.bf16.mxu0 0
        %683 = vmatpush1.bf16.msra.mxu0 0
        %684 = vmatprep.subr.bf16.mxu0 0
        %685 = vmatpush1.bf16.msra.mxu0 0
        %686 = vmatprep.subr.bf16.mxu0 0
        %687 = vmatpush1.bf16.msra.mxu0 0
        %688 = vmatprep.subr.bf16.mxu0 0
        %689 = vmatpush1.bf16.msra.mxu0 0
        %690 = vmatprep.subr.bf16.mxu0 0
        %691 = vmatpush1.bf16.msra.mxu0 0
        %692 = vmatprep.subr.bf16.mxu0 0
        %693 = vmatpush1.bf16.msra.mxu0 0
        %694 = vmatprep.subr.bf16.mxu0 0
        %695 = vmatpush1.bf16.msra.mxu0 0
        %696 = vmatprep.subr.bf16.mxu0 0
        %697 = vmatpush1.bf16.msra.mxu0 0
        %698 = vmatprep.subr.bf16.mxu0 0
        %699 = vmatpush1.bf16.msra.mxu0 0
        %700 = vmatprep.subr.bf16.mxu0 0
        %701 = vmatpush1.bf16.msra.mxu0 0
        %702 = vmatprep.subr.bf16.mxu0 0
        %703 = vmatpush1.bf16.msra.mxu0 0
        %704 = vmatprep.subr.bf16.mxu0 0
        %705 = vmatpush1.bf16.msra.mxu0 0
        %706 = vmatprep.mubr.bf16.mxu0 0
        %707 = vmatmul.mubr.bf16.gmra.mrb[0].mxu0 %v665
        %v708 = vpop.f32.mrb[0].mxu0
        %v709 = vadd.f32 %v626, %v708
        %v710 = vpop.f32.mrb[0].mxu0
        %v711 = vadd.f32 %v630, %v710
        %v712 = vpop.f32.mrb[0].mxu0
        %v713 = vadd.f32 %v626, %v712
        %v714 = vpop.f32.mrb[0].mxu0
        %v715 = vadd.f32 %v630, %v714
        %716 = vdwg.mxu0
        %v717 = vmax.f32 %v709, 0.0
        %v718 = vmax.f32 %v711, 0.0
        %v719 = vmax.f32 %v713, 0.0
        %v720 = vmax.f32 %v715, 0.0
        %v721 = vpack.c.bf16 %v719, %v717
        %v722 = vpack.c.bf16 %v720, %v718
        %v723 = vld [vmem:[#allocation10] sm:$0xf]
        %v724 = vld [vmem:[#allocation10 + $0x4] sm:$0xf]
        %v725 = vld [vmem:[#allocation10 + $0x8] sm:$0xf]
        %v726 = vld [vmem:[#allocation10 + $0xc] sm:$0xf]
        %v727 = vld [vmem:[#allocation10 + $0x10] sm:$0xf]
        %v728 = vld [vmem:[#allocation10 + $0x14] sm:$0xf]
        %v729 = vld [vmem:[#allocation10 + $0x18] sm:$0xf]
        %v730 = vld [vmem:[#allocation10 + $0x1c] sm:$0xf]
        %v731 = vld [vmem:[#allocation10 + $0x20] sm:$0xf]
        %v732 = vld [vmem:[#allocation10 + $0x24] sm:$0xf]
        %v733 = vld [vmem:[#allocation10 + $0x28] sm:$0xf]
        %v734 = vld [vmem:[#allocation10 + $0x2c] sm:$0xf]
        %v735 = vld [vmem:[#allocation10 + $0x30] sm:$0xf]
        %v736 = vld [vmem:[#allocation10 + $0x34] sm:$0xf]
        %v737 = vld [vmem:[#allocation10 + $0x38] sm:$0xf]
        %v738 = vld [vmem:[#allocation10 + $0x3c] sm:$0xf]
        %v739 = vld [vmem:[#allocation10 + $0x40] sm:$0xf]
        %v740 = vld [vmem:[#allocation10 + $0x44] sm:$0xf]
        %v741 = vld [vmem:[#allocation10 + $0x48] sm:$0xf]
        %v742 = vld [vmem:[#allocation10 + $0x4c] sm:$0xf]
        %v743 = vld [vmem:[#allocation10 + $0x50] sm:$0xf]
        %v744 = vld [vmem:[#allocation10 + $0x54] sm:$0xf]
        %v745 = vld [vmem:[#allocation10 + $0x58] sm:$0xf]
        %v746 = vld [vmem:[#allocation10 + $0x5c] sm:$0xf]
        %v747 = vld [vmem:[#allocation10 + $0x60] sm:$0xf]
        %v748 = vld [vmem:[#allocation10 + $0x64] sm:$0xf]
        %v749 = vld [vmem:[#allocation10 + $0x68] sm:$0xf]
        %v750 = vld [vmem:[#allocation10 + $0x6c] sm:$0xf]
        %v751 = vld [vmem:[#allocation10 + $0x70] sm:$0xf]
        %v752 = vld [vmem:[#allocation10 + $0x74] sm:$0xf]
        %v753 = vld [vmem:[#allocation10 + $0x78] sm:$0xf]
        %v754 = vld [vmem:[#allocation10 + $0x7c] sm:$0xf]
        %v755 = vld [vmem:[#allocation12] sm:$0x1]
        %v757 = vlaneseq
        %v758 = vshrl.u32 %v757, 7
        %v759 = vsub.s32 0, %v758
        %v760 = vrot.slane %v755, %v759
        %v794 = vunpack.c.l.b16 %v723
        %v795 = vunpack.c.l.b16 %v724
        %v796 = vunpack.c.l.b16 %v725
        %v797 = vunpack.c.l.b16 %v726
        %v798 = vunpack.c.l.b16 %v727
        %v799 = vunpack.c.l.b16 %v728
        %v800 = vunpack.c.l.b16 %v729
        %v801 = vunpack.c.l.b16 %v730
        %v802 = vunpack.c.l.b16 %v731
        %v803 = vunpack.c.l.b16 %v732
        %v804 = vunpack.c.l.b16 %v733
        %v805 = vunpack.c.l.b16 %v734
        %v806 = vunpack.c.l.b16 %v735
        %v807 = vunpack.c.l.b16 %v736
        %v808 = vunpack.c.l.b16 %v737
        %v809 = vunpack.c.l.b16 %v738
        %v810 = vunpack.c.l.b16 %v739
        %v811 = vunpack.c.l.b16 %v740
        %v812 = vunpack.c.l.b16 %v741
        %v813 = vunpack.c.l.b16 %v742
        %v814 = vunpack.c.l.b16 %v743
        %v815 = vunpack.c.l.b16 %v744
        %v816 = vunpack.c.l.b16 %v745
        %v817 = vunpack.c.l.b16 %v746
        %v818 = vunpack.c.l.b16 %v747
        %v819 = vunpack.c.l.b16 %v748
        %v820 = vunpack.c.l.b16 %v749
        %v821 = vunpack.c.l.b16 %v750
        %v822 = vunpack.c.l.b16 %v751
        %v823 = vunpack.c.l.b16 %v752
        %v824 = vunpack.c.l.b16 %v753
        %v825 = vunpack.c.l.b16 %v754
        %v826 = vpack.c.b16 %v795, %v794
        %v827 = vpack.c.b16 %v797, %v796
        %v828 = vpack.c.b16 %v799, %v798
        %v829 = vpack.c.b16 %v801, %v800
        %v830 = vpack.c.b16 %v803, %v802
        %v831 = vpack.c.b16 %v805, %v804
        %v832 = vpack.c.b16 %v807, %v806
        %v833 = vpack.c.b16 %v809, %v808
        %v834 = vpack.c.b16 %v811, %v810
        %v835 = vpack.c.b16 %v813, %v812
        %v836 = vpack.c.b16 %v815, %v814
        %v837 = vpack.c.b16 %v817, %v816
        %v838 = vpack.c.b16 %v819, %v818
        %v839 = vpack.c.b16 %v821, %v820
        %v840 = vpack.c.b16 %v823, %v822
        %v841 = vpack.c.b16 %v825, %v824
        %858 = vmatprep.subr.bf16.mxu0 0
        %859 = vmatpush1.bf16.msra.mxu0 %v826
        %860 = vmatprep.subr.bf16.mxu0 0
        %861 = vmatpush1.bf16.msra.mxu0 %v827
        %862 = vmatprep.subr.bf16.mxu0 0
        %863 = vmatpush1.bf16.msra.mxu0 %v828
        %864 = vmatprep.subr.bf16.mxu0 0
        %865 = vmatpush1.bf16.msra.mxu0 %v829
        %866 = vmatprep.subr.bf16.mxu0 0
        %867 = vmatpush1.bf16.msra.mxu0 %v830
        %868 = vmatprep.subr.bf16.mxu0 0
        %869 = vmatpush1.bf16.msra.mxu0 %v831
        %870 = vmatprep.subr.bf16.mxu0 0
        %871 = vmatpush1.bf16.msra.mxu0 %v832
        %872 = vmatprep.subr.bf16.mxu0 0
        %873 = vmatpush1.bf16.msra.mxu0 %v833
        %874 = vmatprep.subr.bf16.mxu0 0
        %875 = vmatpush1.bf16.msra.mxu0 %v834
        %876 = vmatprep.subr.bf16.mxu0 0
        %877 = vmatpush1.bf16.msra.mxu0 %v835
        %878 = vmatprep.subr.bf16.mxu0 0
        %879 = vmatpush1.bf16.msra.mxu0 %v836
        %880 = vmatprep.subr.bf16.mxu0 0
        %881 = vmatpush1.bf16.msra.mxu0 %v837
        %882 = vmatprep.subr.bf16.mxu0 0
        %883 = vmatpush1.bf16.msra.mxu0 %v838
        %884 = vmatprep.subr.bf16.mxu0 0
        %885 = vmatpush1.bf16.msra.mxu0 %v839
        %886 = vmatprep.subr.bf16.mxu0 0
        %887 = vmatpush1.bf16.msra.mxu0 %v840
        %888 = vmatprep.subr.bf16.mxu0 0
        %889 = vmatpush1.bf16.msra.mxu0 %v841
        %890 = vmatprep.mubr.bf16.mxu0 %v722
        %891 = vmatmul.mubr.bf16.gmra.mrb[0].mxu0 %v721
        %v892 = vpop.f32.mrb[0].mxu0
        %v893 = vadd.f32 %v760, %v892
        %v894 = vpop.f32.mrb[0].mxu0
        %v895 = vpop.f32.mrb[0].mxu0
        %v896 = vadd.f32 %v760, %v895
        %v897 = vpop.f32.mrb[0].mxu0
        %898 = vdwg.mxu0
        %v899 = vmax.f32 %v893, 0.0
        %v900 = vmax.f32 %v896, 0.0
        %v901 = vpack.c.bf16 %v900, %v899
        %v902 = vld [vmem:[%s7] sm:$0xf]
        %v903 = vld [vmem:[%s7 + $0x4] sm:$0xf]
        %v904 = vld [vmem:[%s7 + $0x8] sm:$0xf]
        %v905 = vld [vmem:[%s7 + $0xc] sm:$0xf]
        %v906 = vld [vmem:[%s7 + $0x10] sm:$0xf]
        %v907 = vld [vmem:[%s7 + $0x14] sm:$0xf]
        %v908 = vld [vmem:[%s7 + $0x18] sm:$0xf]
        %v909 = vld [vmem:[%s7 + $0x1c] sm:$0xf]
        %v910 = vld [vmem:[%s7 + $0x20] sm:$0xf]
        %v911 = vld [vmem:[%s7 + $0x24] sm:$0xf]
        %v912 = vld [vmem:[%s7 + $0x28] sm:$0xf]
        %v913 = vld [vmem:[%s7 + $0x2c] sm:$0xf]
        %v914 = vld [vmem:[%s7 + $0x30] sm:$0xf]
        %v915 = vld [vmem:[%s7 + $0x34] sm:$0xf]
        %v916 = vld [vmem:[%s7 + $0x38] sm:$0xf]
        %v917 = vld [vmem:[%s7 + $0x3c] sm:$0xf]
        %v934 = vunpack.c.l.b16 %v902
        %v935 = vunpack.c.l.b16 %v903
        %v936 = vunpack.c.l.b16 %v904
        %v937 = vunpack.c.l.b16 %v905
        %v938 = vunpack.c.l.b16 %v906
        %v939 = vunpack.c.l.b16 %v907
        %v940 = vunpack.c.l.b16 %v908
        %v941 = vunpack.c.l.b16 %v909
        %v942 = vunpack.c.l.b16 %v910
        %v943 = vunpack.c.l.b16 %v911
        %v944 = vunpack.c.l.b16 %v912
        %v945 = vunpack.c.l.b16 %v913
        %v946 = vunpack.c.l.b16 %v914
        %v947 = vunpack.c.l.b16 %v915
        %v948 = vunpack.c.l.b16 %v916
        %v949 = vunpack.c.l.b16 %v917
        %v950 = vpack.c.b16 %v935, %v934
        %v951 = vpack.c.b16 %v937, %v936
        %v952 = vpack.c.b16 %v939, %v938
        %v953 = vpack.c.b16 %v941, %v940
        %v954 = vpack.c.b16 %v943, %v942
        %v955 = vpack.c.b16 %v945, %v944
        %v956 = vpack.c.b16 %v947, %v946
        %v957 = vpack.c.b16 %v949, %v948
        %966 = vmatprep.subr.bf16.mxu0 0
        %967 = vmatpush1.bf16.msra.mxu0 %v950
        %968 = vmatprep.subr.bf16.mxu0 0
        %969 = vmatpush1.bf16.msra.mxu0 %v951
        %970 = vmatprep.subr.bf16.mxu0 0
        %971 = vmatpush1.bf16.msra.mxu0 %v952
        %972 = vmatprep.subr.bf16.mxu0 0
        %973 = vmatpush1.bf16.msra.mxu0 %v953
        %974 = vmatprep.subr.bf16.mxu0 0
        %975 = vmatpush1.bf16.msra.mxu0 %v954
        %976 = vmatprep.subr.bf16.mxu0 0
        %977 = vmatpush1.bf16.msra.mxu0 %v955
        %978 = vmatprep.subr.bf16.mxu0 0
        %979 = vmatpush1.bf16.msra.mxu0 %v956
        %980 = vmatprep.subr.bf16.mxu0 0
        %981 = vmatpush1.bf16.msra.mxu0 %v957
        %982 = vmatprep.subr.bf16.mxu0 0
        %983 = vmatpush1.bf16.msra.mxu0 0
        %984 = vmatprep.subr.bf16.mxu0 0
        %985 = vmatpush1.bf16.msra.mxu0 0
        %986 = vmatprep.subr.bf16.mxu0 0
        %987 = vmatpush1.bf16.msra.mxu0 0
        %988 = vmatprep.subr.bf16.mxu0 0
        %989 = vmatpush1.bf16.msra.mxu0 0
        %990 = vmatprep.subr.bf16.mxu0 0
        %991 = vmatpush1.bf16.msra.mxu0 0
        %992 = vmatprep.subr.bf16.mxu0 0
        %993 = vmatpush1.bf16.msra.mxu0 0
        %994 = vmatprep.subr.bf16.mxu0 0
        %995 = vmatpush1.bf16.msra.mxu0 0
        %996 = vmatprep.subr.bf16.mxu0 0
        %997 = vmatpush1.bf16.msra.mxu0 0
        %998 = vmatprep.mubr.bf16.mxu0 0
        %999 = vmatmul.mubr.bf16.gmra.mrb[0].mxu0 %v901
        %v1000 = vpop.f32.mrb[0].mxu0
        %v1001 = vadd.f32 0.0, %v1000
        %v1002 = vpop.f32.mrb[0].mxu0
        %v1003 = vpop.f32.mrb[0].mxu0
        %v1004 = vadd.f32 0.0, %v1003
        %v1005 = vpop.f32.mrb[0].mxu0
        %1006 = vdwg.mxu0
        %v1007 = vpack.c.bf16 %v1004, %v1001
        %v1009 = vunpack.c.l.b16 %v1007
        %v1010 = vunpack.c.h.b16 %v1007
        %v1011 = vpack.c.b16 %v1009, %v1009
        %v1012 = vpack.c.b16 %v1010, %v1010
        %1015 = vst [vmem:[%s526] sm:$0xf] %v1011
        %1016 = vst [vmem:[%s526 + $0x4] sm:$0xf] %v1012
        %v1017 = vld [vmem:[#allocation2] sm:$0xff]
        %1018 = vmatprep.subr.bf16.mxu0 0
        %1019 = vmatpush1.bf16.xpose.msra.mxu0 %v901
        %1020 = vmatprep.subr.bf16.mxu0 0
        %1021 = vmatpush1.bf16.xpose.msra.mxu0 0
        %1022 = vmatprep.subr.bf16.mxu0 0
        %1023 = vmatpush1.bf16.xpose.msra.mxu0 0
        %1024 = vmatprep.subr.bf16.mxu0 0
        %1025 = vmatpush1.bf16.xpose.msra.mxu0 0
        %1026 = vmatprep.subr.bf16.mxu0 0
        %1027 = vmatpush1.bf16.xpose.msra.mxu0 0
        %1028 = vmatprep.subr.bf16.mxu0 0
        %1029 = vmatpush1.bf16.xpose.msra.mxu0 0
        %1030 = vmatprep.subr.bf16.mxu0 0
        %1031 = vmatpush1.bf16.xpose.msra.mxu0 0
        %1032 = vmatprep.subr.bf16.mxu0 0
        %1033 = vmatpush1.bf16.xpose.msra.mxu0 0
        %1034 = vmatprep.subr.bf16.mxu0 0
        %1035 = vmatpush1.bf16.xpose.msra.mxu0 0
        %1036 = vmatprep.subr.bf16.mxu0 0
        %1037 = vmatpush1.bf16.xpose.msra.mxu0 0
        %1038 = vmatprep.subr.bf16.mxu0 0
        %1039 = vmatpush1.bf16.xpose.msra.mxu0 0
        %1040 = vmatprep.subr.bf16.mxu0 0
        %1041 = vmatpush1.bf16.xpose.msra.mxu0 0
        %1042 = vmatprep.subr.bf16.mxu0 0
        %1043 = vmatpush1.bf16.xpose.msra.mxu0 0
        %1044 = vmatprep.subr.bf16.mxu0 0
        %1045 = vmatpush1.bf16.xpose.msra.mxu0 0
        %1046 = vmatprep.subr.bf16.mxu0 0
        %1047 = vmatpush1.bf16.xpose.msra.mxu0 0
        %1048 = vmatprep.subr.bf16.mxu0 0
        %1049 = vmatpush1.bf16.xpose.msra.mxu0 0
        %1050 = vmatprep.mubr.bf16.mxu0 0
        %1051 = vmatmul.mubr.bf16.gmra.mrb[0].mxu0 %v1017
        %v1052 = vpop.f32.mrb[0].mxu0
        %v1053 = vadd.f32 0.0, %v1052
        %v1054 = vpop.f32.mrb[0].mxu0
        %v1055 = vpop.f32.mrb[0].mxu0
        %v1056 = vadd.f32 0.0, %v1055
        %v1057 = vpop.f32.mrb[0].mxu0
        %1058 = vdwg.mxu0
        %v1059 = vmul.f32 %v1053, 0.088388346
        %v1060 = vmul.f32 %v1056, 0.088388346
        %s1061 = smul.u32 %s38, 16
        %v1062 = vlaneseq
        %v1063 = vand.u32 %v1062, 127
        %v1064 = vstv %s1061
        %v1065 = vadd.s32 %v1064, %v1063
        %s1066 = sld [smem:[#allocation7 + %s37]]
        %v1067 = vstv %s1066
        %vm1068 = vcmp.lt.s32.totalorder %v1065, %v1067
        %v1069 = vld [vmem:[#allocation3] sm:$0xff]
        %v1070 = vld [vmem:[#allocation3 + $0x8] sm:$0xff]
        %v1071 = vsel %vm1068, %v1059, -1e+30
        %v1072 = vsel %vm1068, %v1060, -1e+30
        %vm1073 = vcmask 130048
        %v1074 = vsel %vm1073, %v1071, -inf
        %1075 = vmax.xlane.f32.xlu0 %v1074
        %v1076 = vpop.xlane.xlu0 %1075
        %v1077 = vsel %vm1073, %v1072, -inf
        %1078 = vmax.xlane.f32.xlu0 %v1077
        %v1079 = vpop.xlane.xlu0 %1078
        %v1080 = vmax.f32 %v1069, %v1076
        %v1081 = vmax.f32 %v1070, %v1079
        %v1082 = vsub.f32 %v1069, %v1080
        %v1083 = vsub.f32 %v1070, %v1081
        %v1084 = vmul.f32 %v1082, 1.442695
        %v1085 = vpow.pop %v1084
        %v1086 = vmul.f32 %v1083, 1.442695
        %v1087 = vpow.pop %v1086
        %1089 = vset.pattern.permute.xlu0 0
        %1090 = vperm.xlu0 %1089, %v1080
        %v1091 = vpop.permute.xlu0 %1090
        %1094 = vset.pattern.permute.xlu0 0
        %1095 = vperm.xlu0 %1094, %v1081
        %v1096 = vpop.permute.xlu0 %1095
        %v1098 = vsub.f32 %v1059, %v1091
        %v1099 = vsub.f32 %v1060, %v1096
        %v1100 = vmul.f32 %v1098, 1.442695
        %v1101 = vpow.pop %v1100
        %v1102 = vmul.f32 %v1099, 1.442695
        %v1103 = vpow.pop %v1102
        %v1104 = vsel %vm1068, %v1101, 0.0
        %v1105 = vsel %vm1068, %v1103, 0.0
        %v1106 = vld [vmem:[#allocation4] sm:$0xff]
        %v1107 = vld [vmem:[#allocation4 + $0x8] sm:$0xff]
        %v1108 = vmul.f32 %v1085, %v1106
        %v1109 = vmul.f32 %v1087, %v1107
        %v1110 = vsel %vm1073, %v1104, 0.0
        %1111 = vadd.xlane.f32.xlu0 %v1110
        %v1112 = vpop.xlane.xlu0 %1111
        %v1113 = vsel %vm1073, %v1105, 0.0
        %1114 = vadd.xlane.f32.xlu0 %v1113
        %v1115 = vpop.xlane.xlu0 %1114
        %v1116 = vadd.f32 %v1108, %v1112
        %v1117 = vadd.f32 %v1109, %v1115
        %vm1118 = vcmask 7168
        %1119 = vst.msk [vmem:[#allocation4] sm:$0xff] %vm1118, %v1116
        %1120 = vst.msk [vmem:[#allocation4 + $0x8] sm:$0xff] %vm1118, %v1117
        %v1121 = vld [vmem:[#allocation5] sm:$0xff]
        %v1122 = vld [vmem:[#allocation5 + $0x8] sm:$0xff]
        %1124 = vset.pattern.permute.xlu0 0
        %1125 = vperm.xlu0 %1124, %v1085
        %v1126 = vpop.permute.xlu0 %1125
        %1129 = vset.pattern.permute.xlu0 0
        %1130 = vperm.xlu0 %1129, %v1087
        %v1131 = vpop.permute.xlu0 %1130
        %v1133 = vmul.f32 %v1126, %v1121
        %v1134 = vmul.f32 %v1131, %v1122
        %v1135 = vpack.c.bf16 %v1105, %v1104
        %v1137 = vsel %vm1073, %v1135, 0
        %1139 = vmatprep.subr.bf16.mxu0 0
        %1140 = vmatpush1.bf16.msra.mxu0 %v901
        %1141 = vmatprep.subr.bf16.mxu0 0
        %1142 = vmatpush1.bf16.msra.mxu0 0
        %1143 = vmatprep.subr.bf16.mxu0 0
        %1144 = vmatpush1.bf16.msra.mxu0 0
        %1145 = vmatprep.subr.bf16.mxu0 0
        %1146 = vmatpush1.bf16.msra.mxu0 0
        %1147 = vmatprep.subr.bf16.mxu0 0
        %1148 = vmatpush1.bf16.msra.mxu0 0
        %1149 = vmatprep.subr.bf16.mxu0 0
        %1150 = vmatpush1.bf16.msra.mxu0 0
        %1151 = vmatprep.subr.bf16.mxu0 0
        %1152 = vmatpush1.bf16.msra.mxu0 0
        %1153 = vmatprep.subr.bf16.mxu0 0
        %1154 = vmatpush1.bf16.msra.mxu0 0
        %1155 = vmatprep.subr.bf16.mxu0 0
        %1156 = vmatpush1.bf16.msra.mxu0 0
        %1157 = vmatprep.subr.bf16.mxu0 0
        %1158 = vmatpush1.bf16.msra.mxu0 0
        %1159 = vmatprep.subr.bf16.mxu0 0
        %1160 = vmatpush1.bf16.msra.mxu0 0
        %1161 = vmatprep.subr.bf16.mxu0 0
        %1162 = vmatpush1.bf16.msra.mxu0 0
        %1163 = vmatprep.subr.bf16.mxu0 0
        %1164 = vmatpush1.bf16.msra.mxu0 0
        %1165 = vmatprep.subr.bf16.mxu0 0
        %1166 = vmatpush1.bf16.msra.mxu0 0
        %1167 = vmatprep.subr.bf16.mxu0 0
        %1168 = vmatpush1.bf16.msra.mxu0 0
        %1169 = vmatprep.subr.bf16.mxu0 0
        %1170 = vmatpush1.bf16.msra.mxu0 0
        %1171 = vmatprep.mubr.bf16.mxu0 0
        %1172 = vmatmul.mubr.bf16.gmra.mrb[0].mxu0 %v1137
        %v1173 = vpop.f32.mrb[0].mxu0
        %v1174 = vadd.f32 0.0, %v1173
        %v1175 = vpop.f32.mrb[0].mxu0
        %v1176 = vpop.f32.mrb[0].mxu0
        %v1177 = vadd.f32 0.0, %v1176
        %v1178 = vpop.f32.mrb[0].mxu0
        %1179 = vdwg.mxu0
        %v1180 = vadd.f32 %v1133, %v1174
        %v1181 = vadd.f32 %v1134, %v1177
        %1182 = vst [vmem:[#allocation5] sm:$0xff] %v1180
        %1183 = vst [vmem:[#allocation5 + $0x8] sm:$0xff] %v1181
        %1184 = vst.msk [vmem:[#allocation3] sm:$0xff] %vm1118, %v1080
        %1185 = vst.msk [vmem:[#allocation3 + $0x8] sm:$0xff] %vm1118, %v1081
        // Predicated region
        $region85: #{asr_forward.1} parent=59 // pred_check
          %p1186 = pneg %p534
        $region86: #{asr_forward.1} parent=59 // pred_check_branch
          %1188 = sbr.rel (%p1186) target = $region88
        $region87: #{asr_forward.1} parent=59 // pred_region
          %v1189 = vld [vmem:[#allocation4] sm:$0xff]
          %v1190 = vld [vmem:[#allocation4 + $0x8] sm:$0xff]
          %v1191 = vmax.f32 %v1189, 1e-30
          %v1192 = vmax.f32 %v1190, 1e-30
          %v1193 = vrcp.pop %v1191
          %v1194 = vrcp.pop %v1192
          %v1195 = vld [vmem:[#allocation5] sm:$0xff]
          %v1196 = vld [vmem:[#allocation5 + $0x8] sm:$0xff]
          %1198 = vset.pattern.permute.xlu0 0
          %1199 = vperm.xlu0 %1198, %v1193
          %v1200 = vpop.permute.xlu0 %1199
          %1203 = vset.pattern.permute.xlu0 0
          %1204 = vperm.xlu0 %1203, %v1194
          %v1205 = vpop.permute.xlu0 %1204
          %v1207 = vmul.f32 %v1195, %v1200
          %v1208 = vmul.f32 %v1196, %v1205
          %v1209 = vpack.c.bf16 %v1208, %v1207
          %v1210 = vld [vmem:[#allocation15] sm:$0xf]
          %v1211 = vld [vmem:[#allocation15 + $0x4] sm:$0xf]
          %v1212 = vld [vmem:[#allocation15 + $0x8] sm:$0xf]
          %v1213 = vld [vmem:[#allocation15 + $0xc] sm:$0xf]
          %v1214 = vld [vmem:[#allocation15 + $0x10] sm:$0xf]
          %v1215 = vld [vmem:[#allocation15 + $0x14] sm:$0xf]
          %v1216 = vld [vmem:[#allocation15 + $0x18] sm:$0xf]
          %v1217 = vld [vmem:[#allocation15 + $0x1c] sm:$0xf]
          %v1218 = vld [vmem:[#allocation15 + $0x20] sm:$0xf]
          %v1219 = vld [vmem:[#allocation15 + $0x24] sm:$0xf]
          %v1220 = vld [vmem:[#allocation15 + $0x28] sm:$0xf]
          %v1221 = vld [vmem:[#allocation15 + $0x2c] sm:$0xf]
          %v1222 = vld [vmem:[#allocation15 + $0x30] sm:$0xf]
          %v1223 = vld [vmem:[#allocation15 + $0x34] sm:$0xf]
          %v1224 = vld [vmem:[#allocation15 + $0x38] sm:$0xf]
          %v1225 = vld [vmem:[#allocation15 + $0x3c] sm:$0xf]
          %v1242 = vunpack.c.l.b16 %v1210
          %v1243 = vunpack.c.l.b16 %v1211
          %v1244 = vunpack.c.l.b16 %v1212
          %v1245 = vunpack.c.l.b16 %v1213
          %v1246 = vunpack.c.l.b16 %v1214
          %v1247 = vunpack.c.l.b16 %v1215
          %v1248 = vunpack.c.l.b16 %v1216
          %v1249 = vunpack.c.l.b16 %v1217
          %v1250 = vunpack.c.l.b16 %v1218
          %v1251 = vunpack.c.l.b16 %v1219
          %v1252 = vunpack.c.l.b16 %v1220
          %v1253 = vunpack.c.l.b16 %v1221
          %v1254 = vunpack.c.l.b16 %v1222
          %v1255 = vunpack.c.l.b16 %v1223
          %v1256 = vunpack.c.l.b16 %v1224
          %v1257 = vunpack.c.l.b16 %v1225
          %v1258 = vpack.c.b16 %v1243, %v1242
          %v1259 = vpack.c.b16 %v1245, %v1244
          %v1260 = vpack.c.b16 %v1247, %v1246
          %v1261 = vpack.c.b16 %v1249, %v1248
          %v1262 = vpack.c.b16 %v1251, %v1250
          %v1263 = vpack.c.b16 %v1253, %v1252
          %v1264 = vpack.c.b16 %v1255, %v1254
          %v1265 = vpack.c.b16 %v1257, %v1256
          %1274 = vmatprep.subr.bf16.mxu0 0
          %1275 = vmatpush1.bf16.msra.mxu0 %v1258
          %1276 = vmatprep.subr.bf16.mxu0 0
          %1277 = vmatpush1.bf16.msra.mxu0 %v1259
          %1278 = vmatprep.subr.bf16.mxu0 0
          %1279 = vmatpush1.bf16.msra.mxu0 %v1260
          %1280 = vmatprep.subr.bf16.mxu0 0
          %1281 = vmatpush1.bf16.msra.mxu0 %v1261
          %1282 = vmatprep.subr.bf16.mxu0 0
          %1283 = vmatpush1.bf16.msra.mxu0 %v1262
          %1284 = vmatprep.subr.bf16.mxu0 0
          %1285 = vmatpush1.bf16.msra.mxu0 %v1263
          %1286 = vmatprep.subr.bf16.mxu0 0
          %1287 = vmatpush1.bf16.msra.mxu0 %v1264
          %1288 = vmatprep.subr.bf16.mxu0 0
          %1289 = vmatpush1.bf16.msra.mxu0 %v1265
          %1290 = vmatprep.subr.bf16.mxu0 0
          %1291 = vmatpush1.bf16.msra.mxu0 0
          %1292 = vmatprep.subr.bf16.mxu0 0
          %1293 = vmatpush1.bf16.msra.mxu0 0
          %1294 = vmatprep.subr.bf16.mxu0 0
          %1295 = vmatpush1.bf16.msra.mxu0 0
          %1296 = vmatprep.subr.bf16.mxu0 0
          %1297 = vmatpush1.bf16.msra.mxu0 0
          %1298 = vmatprep.subr.bf16.mxu0 0
          %1299 = vmatpush1.bf16.msra.mxu0 0
          %1300 = vmatprep.subr.bf16.mxu0 0
          %1301 = vmatpush1.bf16.msra.mxu0 0
          %1302 = vmatprep.subr.bf16.mxu0 0
          %1303 = vmatpush1.bf16.msra.mxu0 0
          %1304 = vmatprep.subr.bf16.mxu0 0
          %1305 = vmatpush1.bf16.msra.mxu0 0
          %1306 = vmatprep.mubr.bf16.mxu0 0
          %1307 = vmatmul.mubr.bf16.gmra.mrb[0].mxu0 %v1209
          %v1308 = vpop.f32.mrb[0].mxu0
          %v1309 = vadd.f32 0.0, %v1308
          %v1310 = vpop.f32.mrb[0].mxu0
          %v1311 = vpop.f32.mrb[0].mxu0
          %v1312 = vadd.f32 0.0, %v1311
          %v1313 = vpop.f32.mrb[0].mxu0
          %1314 = vdwg.mxu0
          %1315 = vst [vmem:[%s532] sm:$0xff] %v1309
          %1316 = vst [vmem:[%s532 + $0x8] sm:$0xff] %v1312
        $region88: #{asr_forward.1} parent=59 // pred_fallthru
          _
        %s1317 = smul.u32 2, %s38
        %p1318 = scmp.lt.s32.totalorder %s37, 1
        %s1319 = scalar_select %p1318, %s37, 1
        %p1320 = scmp.lt.s32.totalorder %s1317, 1
        %s1321 = scalar_select %p1320, %s1317, 1
        %s1322 = smul.addr %s1319, 2
        %s1323 = sadd.s32 %s1321, %s1322
        %s1324 = smul.addr %s1323, 4
        %s1325 = scalar_lea.vmem %s11, %s1324
        %p1326 = scmp.lt.s32.totalorder %s37, 1
        %s1327 = scalar_select %p1326, %s37, 1
        %s1328 = smul.addr %s1327, 2
        %s1329 = smul.addr %s1328, 8
        %s1330 = scalar_lea.vmem %s12, %s1329
        // Predicated region
        $region89: #{asr_forward.1} parent=59 // pred_check
          %p1331 = pneg %p287
        $region90: #{asr_forward.1} parent=59 // pred_check_branch
          %1333 = sbr.rel (%p1331) target = $region92
        $region91: #{asr_forward.1} parent=59 // pred_region
          %s1334 = smul.u32 2, %s38
        $region92: #{asr_forward.1} parent=59 // pred_fallthru
          _
        // Predicated region
        $region93: #{asr_forward.1} parent=59 // pred_check
          %p1335 = pneg %p313
        $region94: #{asr_forward.1} parent=59 // pred_check_branch
          %1337 = sbr.rel (%p1335) target = $region96
        $region95: #{asr_forward.1} parent=59 // pred_region
          _
        $region96: #{asr_forward.1} parent=59 // pred_fallthru
          _
      $region60: #{asr_forward.1} parent=5 // pred_fallthru
        _
      %p1338 = scmp.le.s32.totalorder 2, %s28
      // Predicated region
      $region97: #{asr_forward.1} parent=5 // pred_check
        %p1339 = pneg %p1338
      $region98: #{asr_forward.1} parent=5 // pred_check_branch
        %1341 = sbr.rel (%p1339) target = $region100
      $region99: #{asr_forward.1} parent=5 // pred_region
        %s1342 = ssub.s32 %s28, 2
        // Predicated region
        $region101: #{asr_forward.1} parent=99 // pred_check
          %p1343 = pneg %p293
        $region102: #{asr_forward.1} parent=99 // pred_check_branch
          %1345 = sbr.rel (%p1343) target = $region104
        $region103: #{asr_forward.1} parent=99 // pred_region
          %s1346 = smul.u32 2, %s40
          %p1347 = scmp.lt.s32.totalorder %s39, 1
          %s1348 = scalar_select %p1347, %s39, 1
          %p1349 = scmp.lt.s32.totalorder %s1346, 1
          %s1350 = scalar_select %p1349, %s1346, 1
          %s1351 = smul.addr %s1348, 2
          %s1352 = sadd.s32 %s1350, %s1351
          %s1353 = smul.addr %s1352, 4
          %s1354 = scalar_lea.vmem %s11, %s1353
        $region104: #{asr_forward.1} parent=99 // pred_fallthru
          _
        // Predicated region
        $region105: #{asr_forward.1} parent=99 // pred_check
          %p1355 = pneg %p319
        $region106: #{asr_forward.1} parent=99 // pred_check_branch
          %1357 = sbr.rel (%p1355) target = $region108
        $region107: #{asr_forward.1} parent=99 // pred_region
          %p1358 = scmp.lt.s32.totalorder %s39, 1
          %s1359 = scalar_select %p1358, %s39, 1
          %s1360 = smul.addr %s1359, 2
          %s1361 = smul.addr %s1360, 8
          %s1362 = scalar_lea.vmem %s12, %s1361
        $region108: #{asr_forward.1} parent=99 // pred_fallthru
          _
      $region100: #{asr_forward.1} parent=5 // pred_fallthru
        _
    $region6: #{asr_forward.1} parent=1 // loop_footer
      %s32 = sadd.s32 1, %s28
    $region7: #{asr_forward.1} parent=1 // loop_footer_branch
      %27 = sbr.rel target = $region3
    $region8: #{asr_forward.1} parent=1 // loop_exit
      _
    %1363 = vsyncpa [#allocation9], 1
    %s1364 = scalar_lea.sflag [#allocation9], 1
    %1365 = vsyncpa %s1364, 1
    %1366 = vsyncpa [#allocation11], 1
    %1367 = vsyncpa [#allocation14], 1

</llo_original>
